<compile_context>
chip_gen: v6e
topology: v6e:2x2x1
jax: 0.10.0
libtpu: 0.0.40
codegen_flags: <defaults>
</compile_context>

<pallas_src>
import functools

import jax
import jax.numpy as jnp
from jax.experimental import pallas as pl
from jax.experimental.pallas import tpu as pltpu

# ---------------------------------------------------------------------------
# Static model configuration (Conv(vocab_size=50, embedding_dim=32)).
# ---------------------------------------------------------------------------
NEG_SLOPE = 0.01          # torch leaky_relu default
BN_EPS = 1e-5             # torch BatchNorm1d default
VOCAB = 50
EMB = 32
MAX_LEN = 20
N_CLASSES = 6
K = 3                     # Conv1d kernel size
N_CONVS = 6
L_FINAL = MAX_LEN - N_CONVS * (K - 1)        # 8 valid positions after 6 convs

CH = 128                  # padded channel width == TPU lane width
KW = K * CH               # rows per packed conv-weight block (384)
VOCAB_PAD = 128           # embedding-table rows padded to a full lane tile
HEAD_OFF = N_CONVS * KW             # 2304  folded (intlin.lin) weight rows
TAB_OFF = HEAD_OFF + CH             # 2432  embedding table rows
TOTAL_ROWS = TAB_OFF + VOCAB_PAD    # 2560
LPAD = ((MAX_LEN + 7) // 8) * 8     # 24: per-sequence rows, sublane aligned
N_BIAS_ROWS = 8

# The retained output positions [0, L_FINAL) must only ever see real
# (non-padded, non-wrapped) embedding rows through their receptive field.
assert L_FINAL + N_CONVS * (K - 1) <= MAX_LEN, "roll/padding trick would break"
assert LPAD >= MAX_LEN and LPAD % 8 == 0


# ---------------------------------------------------------------------------
# Kernel
# ---------------------------------------------------------------------------
def conv_forward_kernel(ids_ref, w_ref, b_ref, out_ref, *, tb, lpad):
    n = tb * lpad

    # Hoisted loads used immediately / throughout (head weight is NOT hoisted).
    biases = b_ref[...]                                    # (8, 128) f32
    table = w_ref[TAB_OFF:TAB_OFF + VOCAB_PAD, :]          # (128, 128) bf16

    # ---- embedding gather as a full-lane one-hot @ table MXU matmul ----
    ids = ids_ref[...]                                     # (n, 1) int32
    vocab_iota = jax.lax.broadcasted_iota(jnp.int32, (n, VOCAB_PAD), 1)
    onehot = (vocab_iota == ids).astype(jnp.bfloat16)
    # TODO(synk): ids outside [0, VOCAB) give an all-zero one-hot row (silent
    # zero embedding) instead of raising, unlike torch.nn.Embedding.
    x = jnp.dot(onehot, table, preferred_element_type=jnp.float32)   # (n,128)

    # ---- 6 conv layers: im2col taps via XLU rolls, one MXU matmul each.
    # Rolled (wrapped) rows only ever land at per-sequence positions >= 22,
    # which are outside every valid receptive field (asserted above).
    # BN1/BN2 folded offline into conv3/conv5; Dropout identity at inference.
    for l in range(N_CONVS):
        w_l = w_ref[l * KW:(l + 1) * KW, :]                # (384, 128) bf16
        xc = jnp.concatenate(
            [x,
             pltpu.roll(x, shift=n - 1, axis=0),           # row i -> x[i+1]
             pltpu.roll(x, shift=n - 2, axis=0)],          # row i -> x[i+2]
            axis=-1).astype(jnp.bfloat16)                  # (n, 384)
        y = jnp.dot(xc, w_l, preferred_element_type=jnp.float32)
        y = y + biases[l:l + 1, :]
        x = jnp.maximum(y, NEG_SLOPE * y)                  # leaky relu, f32

    # ---- masked max over the L_FINAL valid positions of every sequence ----
    act = x.reshape(tb, lpad, CH)                          # free: lpad % 8 == 0
    pos = jax.lax.broadcasted_iota(jnp.int32, (tb, lpad, CH), 1)
    feats = jnp.max(jnp.where(pos < L_FINAL, act, -1e30), axis=1)   # (tb, 128)

    # ---- head: single folded (intlin . lin) matmul + masked exact softmax ----
    head_w = w_ref[HEAD_OFF:HEAD_OFF + CH, :]              # (128, 128) bf16
    logits = jnp.dot(feats.astype(jnp.bfloat16), head_w,
                     preferred_element_type=jnp.float32) + biases[6:7, :]
    cls = jax.lax.broadcasted_iota(jnp.int32, logits.shape, 1)
    logits = jnp.where(cls < N_CLASSES, logits, -1e30)
    z = logits - jnp.max(logits, axis=1, keepdims=True)
    e = jnp.exp(z)
    out_ref[...] = e / jnp.sum(e, axis=1, keepdims=True)   # exact normalization


# ---------------------------------------------------------------------------
# Wrapper
# ---------------------------------------------------------------------------
def conv_forward(x_ids, packed, *, block_b=8):
    B, L = x_ids.shape
    assert L == MAX_LEN, (L, MAX_LEN)

    # Pad each sequence to LPAD rows (token 0; never reaches a valid output)
    # and pad the batch to a multiple of the batch block.
    ids = jnp.pad(x_ids.astype(jnp.int32), ((0, 0), (0, LPAD - L)))
    tb = min(block_b, B)
    b_pad = -(-B // tb) * tb
    if b_pad != B:
        ids = jnp.pad(ids, ((0, b_pad - B), (0, 0)))
    ids_flat = ids.reshape(b_pad * LPAD, 1)

    kernel = functools.partial(conv_forward_kernel, tb=tb, lpad=LPAD)
    out = pl.pallas_call(
        kernel,
        out_shape=jax.ShapeDtypeStruct((b_pad, CH), jnp.float32),
        grid_spec=pltpu.PrefetchScalarGridSpec(
            num_scalar_prefetch=0,
            grid=(b_pad // tb,),
            in_specs=[
                pl.BlockSpec((tb * LPAD, 1), lambda i: (i, 0)),      # ids
                pl.BlockSpec((TOTAL_ROWS, CH), lambda i: (0, 0)),    # weights
                pl.BlockSpec((N_BIAS_ROWS, CH), lambda i: (0, 0)),   # biases
            ],
            out_specs=pl.BlockSpec((tb, CH), lambda i: (i, 0)),
        ),
        compiler_params=pltpu.CompilerParams(
            dimension_semantics=("parallel",),
            vmem_limit_bytes=16 * 1024 * 1024),
    )(ids_flat, packed["wpack"], packed["bias"])
    return out[:B, :N_CLASSES]       # lane-dense kernel output, slice to 6


# ---------------------------------------------------------------------------
# Parameter construction / packing (offline, not on the hot path)
# ---------------------------------------------------------------------------
def init_params(key, vocab_size=VOCAB, embedding_dim=EMB):
    """Raw per-layer params.  Conv weights use (K, Cin, Cout) == transpose of
    the torch (Cout, Cin, K) layout."""
    E = embedding_dim
    ks = jax.random.split(key, 19)

    def w(k, shape, scale=0.1):
        return (scale * jax.random.normal(k, shape)).astype(jnp.float32)

    def bn(k, c):
        k1, k2, k3, k4 = jax.random.split(k, 4)
        return dict(
            gamma=(1.0 + 0.2 * jax.random.normal(k1, (1, c))).astype(jnp.float32),
            beta=(0.1 * jax.random.normal(k2, (1, c))).astype(jnp.float32),
            mean=(0.1 * jax.random.normal(k3, (1, c))).astype(jnp.float32),
            var=(0.5 + jax.random.uniform(k4, (1, c))).astype(jnp.float32),
        )

    return {
        "emb": w(ks[0], (vocab_size, E), 1.0),
        "c1w": w(ks[1], (K, E, 128)),   "c1b": w(ks[2], (1, 128)),
        "c2w": w(ks[3], (K, 128, 128)), "c2b": w(ks[4], (1, 128)),
        "bn1": bn(ks[5], 128),
        "c3w": w(ks[6], (K, 128, 64)),  "c3b": w(ks[7], (1, 64)),
        "c4w": w(ks[8], (K, 64, 64)),   "c4b": w(ks[9], (1, 64)),
        "bn2": bn(ks[10], 64),
        "c5w": w(ks[11], (K, 64, 64)),  "c5b": w(ks[12], (1, 64)),
        "c6w": w(ks[13], (K, 64, E)),   "c6b": w(ks[14], (1, E)),
        "intw": w(ks[15], (E, 128)),    "intb": w(ks[16], (1, 128)),
        "linw": w(ks[17], (128, N_CLASSES)),
        "linb": w(ks[18], (1, N_CLASSES)),
    }


def pack_params(p):
    f32 = jnp.float32

    def bn_scale_shift(q):
        s = (q["gamma"] * jax.lax.rsqrt(q["var"] + BN_EPS)).reshape(-1)
        t = q["beta"].reshape(-1) - q["mean"].reshape(-1) * s
        return s, t

    # Fold each inference BatchNorm (an affine z = a*s + t on the *input*
    # channels of the following conv) into that conv:
    #   W'[k,i,o] = W[k,i,o] * s[i]      b'[o] = b[o] + sum_{k,i} W[k,i,o]*t[i]
    s1, t1 = bn_scale_shift(p["bn1"])      # folds into c3
    s2, t2 = bn_scale_shift(p["bn2"])      # folds into c5
    conv_w = [p["c1w"], p["c2w"], p["c3w"] * s1[None, :, None], p["c4w"],
              p["c5w"] * s2[None, :, None], p["c6w"]]
    conv_b = [p["c1b"], p["c2b"],
              p["c3b"] + jnp.einsum("kio,i->o", p["c3w"], t1)[None, :],
              p["c4b"],
              p["c5b"] + jnp.einsum("kio,i->o", p["c5w"], t2)[None, :],
              p["c6b"]]

    # One bf16 slab: 6 x (K*128, 128) im2col conv weights, folded head, table.
    blocks = []
    for w in conv_w:
        _, cin, cout = w.shape
        wp = jnp.zeros((K, CH, CH), f32).at[:, :cin, :cout].set(w)
        blocks.append(wp.reshape(K * CH, CH))

    # Head: fold intlin and lin (no nonlinearity between them) into one matmul.
    intw = jnp.zeros((CH, CH), f32).at[:EMB, :].set(p["intw"])
    linw = jnp.zeros((CH, CH), f32).at[:, :N_CLASSES].set(p["linw"])
    head_w = intw @ linw                                          # (128, 128)
    head_b = (p["intb"].astype(f32) @ linw +
              jnp.zeros((1, CH), f32).at[:, :N_CLASSES].set(p["linb"]))

    table = jnp.zeros((VOCAB_PAD, CH), f32).at[:VOCAB, :EMB].set(p["emb"])
    wpack = jnp.concatenate(blocks + [head_w, table],
                            axis=0).astype(jnp.bfloat16)
    assert wpack.shape == (TOTAL_ROWS, CH), wpack.shape

    # One f32 (8, 128) bias tile: 6 conv biases, folded head bias, zero pad.
    def row(b):
        return jnp.pad(b.astype(f32), ((0, 0), (0, CH - b.shape[1])))
    bias = jnp.concatenate([row(b) for b in conv_b] +
                           [head_b, jnp.zeros((1, CH), f32)], axis=0)
    assert bias.shape == (N_BIAS_ROWS, CH), bias.shape

    return {"wpack": wpack, "bias": bias}


# ---------------------------------------------------------------------------
# Pure-JAX fp32 reference (identical math to the PyTorch eval() forward).
# ---------------------------------------------------------------------------
def conv_forward_ref(x_ids, params):
    emb = params["emb"][x_ids]                       # (B, L, E)

    def conv(x, w, b):
        kk = w.shape[0]
        lout = x.shape[1] - kk + 1
        acc = jnp.zeros((x.shape[0], lout, w.shape[2]), jnp.float32)
        for k in range(kk):
            acc = acc + jnp.einsum("blc,cd->bld", x[:, k:k + lout, :], w[k])
        return acc + b

    def bn(x, q):
        return (x - q["mean"]) * (q["gamma"] *
                                  jax.lax.rsqrt(q["var"] + BN_EPS)) + q["beta"]

    lr = lambda v: jnp.where(v > 0, v, NEG_SLOPE * v)
    y = lr(conv(emb, params["c1w"], params["c1b"]))
    y = lr(conv(y, params["c2w"], params["c2b"]))
    y = bn(y, params["bn1"])
    y = lr(conv(y, params["c3w"], params["c3b"]))
    y = lr(conv(y, params["c4w"], params["c4b"]))
    # Dropout(0.2): identity at inference.
    y = bn(y, params["bn2"])
    y = lr(conv(y, params["c5w"], params["c5b"]))
    y = lr(conv(y, params["c6w"], params["c6b"]))
    y = jnp.max(y, axis=1)                           # max over length
    y = y @ params["intw"] + params["intb"]
    y = y @ params["linw"] + params["linb"]
    return jax.nn.softmax(y, axis=1)


# ---------------------------------------------------------------------------
if __name__ == "__main__":
    batch = 2
    key = jax.random.PRNGKey(0)
    k_ids, k_params = jax.random.split(key)
    x_ids = jax.random.randint(k_ids, (batch, MAX_LEN), 0, VOCAB,
                               dtype=jnp.int32)
    params = init_params(k_params)
    packed = pack_params(params)           # one-time parameter prep

    fwd = jax.jit(conv_forward)
    out = jax.block_until_ready(fwd(x_ids, packed))
    ref = jax.block_until_ready(conv_forward_ref(x_ids, params))

    assert out.shape == (batch, N_CLASSES), out.shape
    assert bool(jnp.all(jnp.isfinite(out)))
    assert bool(jnp.allclose(jnp.sum(out, axis=1), 1.0, atol=1e-3))
    # bf16 MXU operands vs. the fp32 reference.
    assert bool(jnp.allclose(out, ref, rtol=2e-2, atol=2e-2)), (out, ref)
    print("KERNEL_OK")
</pallas_src>

<mosaic_0001>
module attributes {stable_mosaic.version = 11 : i64} {
  func.func @conv_forward_kernel(%arg0: i32, %arg1: memref<48x1xi32, #tpu.memory_space<vmem>>, %arg2: memref<2560x128xbf16, #tpu.memory_space<vmem>>, %arg3: memref<8x128xf32, #tpu.memory_space<vmem>>, %arg4: memref<2x128xf32, #tpu.memory_space<vmem>>) attributes {dimension_semantics = [#tpu.dimension_semantics<parallel>], iteration_bounds = array<i64: 1>, scalar_prefetch = 0 : i64, scratch_operands = 0 : i64, tpu.core_type = #tpu.core_type<tc>, window_params = [{transform_indices = @transform_0, window_bounds = array<i64: 48, 1>}, {pipeline_mode = #tpu.pipeline_mode<synchronous>, transform_indices = @transform_1, window_bounds = array<i64: 2560, 128>}, {pipeline_mode = #tpu.pipeline_mode<synchronous>, transform_indices = @transform_2, window_bounds = array<i64: 8, 128>}, {transform_indices = @transform_3, window_bounds = array<i64: 2, 128>}]} {
    %c0 = arith.constant 0 : index
    %c0_0 = arith.constant 0 : index
    %0 = vector.load %arg3[%c0, %c0_0] : memref<8x128xf32, #tpu.memory_space<vmem>>, vector<8x128xf32>
    %c2432 = arith.constant 2432 : index
    %c0_1 = arith.constant 0 : index
    %1 = vector.load %arg2[%c2432, %c0_1] : memref<2560x128xbf16, #tpu.memory_space<vmem>>, vector<128x128xbf16>
    %c0_2 = arith.constant 0 : index
    %c0_3 = arith.constant 0 : index
    %2 = vector.load %arg1[%c0_2, %c0_3] : memref<48x1xi32, #tpu.memory_space<vmem>>, vector<48x1xi32>
    %3 = tpu.iota {dimensions = array<i32: 1>} : vector<48x128xi32>
    %4 = vector.broadcast %2 : vector<48x1xi32> to vector<48x128xi32>
    %5 = arith.cmpi eq, %3, %4 : vector<48x128xi32>
    %6 = arith.extui %5 : vector<48x128xi1> to vector<48x128xi32>
    %7 = arith.sitofp %6 : vector<48x128xi32> to vector<48x128xf32>
    %8 = arith.truncf %7 : vector<48x128xf32> to vector<48x128xbf16>
    %cst = arith.constant dense<0.000000e+00> : vector<48x128xf32>
    %9 = tpu.matmul %8, %1, %cst {dimension_numbers = #tpu.dot_dimension_numbers<[1], [0], [0], [1], [0, 0, 1, 1], [], []>} : vector<48x128xbf16>, vector<128x128xbf16>, vector<48x128xf32> -> vector<48x128xf32>
    %c0_4 = arith.constant 0 : index
    %c0_5 = arith.constant 0 : index
    %10 = vector.load %arg2[%c0_4, %c0_5] : memref<2560x128xbf16, #tpu.memory_space<vmem>>, vector<384x128xbf16>
    %c47_i32 = arith.constant 47 : i32
    %11 = tpu.dynamic_rotate %9 by %c47_i32 dim 0 : vector<48x128xf32>, i32 -> vector<48x128xf32>
    %c46_i32 = arith.constant 46 : i32
    %12 = tpu.dynamic_rotate %9 by %c46_i32 dim 0 : vector<48x128xf32>, i32 -> vector<48x128xf32>
    %13 = tpu.concatenate %9, %11, %12 in 1 : vector<48x128xf32>, vector<48x128xf32>, vector<48x128xf32> -> vector<48x384xf32>
    %14 = arith.truncf %13 : vector<48x384xf32> to vector<48x384xbf16>
    %cst_6 = arith.constant dense<0.000000e+00> : vector<48x128xf32>
    %15 = tpu.matmul %14, %10, %cst_6 {dimension_numbers = #tpu.dot_dimension_numbers<[1], [0], [0], [1], [0, 0, 1, 1], [], []>} : vector<48x384xbf16>, vector<384x128xbf16>, vector<48x128xf32> -> vector<48x128xf32>
    %16 = vector.extract_strided_slice %0 {offsets = [0, 0], sizes = [1, 128], strides = [1, 1]} : vector<8x128xf32> to vector<1x128xf32>
    %17 = vector.broadcast %16 : vector<1x128xf32> to vector<48x128xf32>
    %18 = arith.addf %15, %17 : vector<48x128xf32>
    %cst_7 = arith.constant 0.00999999977 : f32
    %19 = vector.broadcast %cst_7 : f32 to vector<48x128xf32>
    %20 = arith.mulf %19, %18 : vector<48x128xf32>
    %21 = arith.maximumf %18, %20 : vector<48x128xf32>
    %c384 = arith.constant 384 : index
    %c0_8 = arith.constant 0 : index
    %22 = vector.load %arg2[%c384, %c0_8] : memref<2560x128xbf16, #tpu.memory_space<vmem>>, vector<384x128xbf16>
    %c47_i32_9 = arith.constant 47 : i32
    %23 = tpu.dynamic_rotate %21 by %c47_i32_9 dim 0 : vector<48x128xf32>, i32 -> vector<48x128xf32>
    %c46_i32_10 = arith.constant 46 : i32
    %24 = tpu.dynamic_rotate %21 by %c46_i32_10 dim 0 : vector<48x128xf32>, i32 -> vector<48x128xf32>
    %25 = tpu.concatenate %21, %23, %24 in 1 : vector<48x128xf32>, vector<48x128xf32>, vector<48x128xf32> -> vector<48x384xf32>
    %26 = arith.truncf %25 : vector<48x384xf32> to vector<48x384xbf16>
    %cst_11 = arith.constant dense<0.000000e+00> : vector<48x128xf32>
    %27 = tpu.matmul %26, %22, %cst_11 {dimension_numbers = #tpu.dot_dimension_numbers<[1], [0], [0], [1], [0, 0, 1, 1], [], []>} : vector<48x384xbf16>, vector<384x128xbf16>, vector<48x128xf32> -> vector<48x128xf32>
    %28 = vector.extract_strided_slice %0 {offsets = [1, 0], sizes = [1, 128], strides = [1, 1]} : vector<8x128xf32> to vector<1x128xf32>
    %29 = vector.broadcast %28 : vector<1x128xf32> to vector<48x128xf32>
    %30 = arith.addf %27, %29 : vector<48x128xf32>
    %cst_12 = arith.constant 0.00999999977 : f32
    %31 = vector.broadcast %cst_12 : f32 to vector<48x128xf32>
    %32 = arith.mulf %31, %30 : vector<48x128xf32>
    %33 = arith.maximumf %30, %32 : vector<48x128xf32>
    %c768 = arith.constant 768 : index
    %c0_13 = arith.constant 0 : index
    %34 = vector.load %arg2[%c768, %c0_13] : memref<2560x128xbf16, #tpu.memory_space<vmem>>, vector<384x128xbf16>
    %c47_i32_14 = arith.constant 47 : i32
    %35 = tpu.dynamic_rotate %33 by %c47_i32_14 dim 0 : vector<48x128xf32>, i32 -> vector<48x128xf32>
    %c46_i32_15 = arith.constant 46 : i32
    %36 = tpu.dynamic_rotate %33 by %c46_i32_15 dim 0 : vector<48x128xf32>, i32 -> vector<48x128xf32>
    %37 = tpu.concatenate %33, %35, %36 in 1 : vector<48x128xf32>, vector<48x128xf32>, vector<48x128xf32> -> vector<48x384xf32>
    %38 = arith.truncf %37 : vector<48x384xf32> to vector<48x384xbf16>
    %cst_16 = arith.constant dense<0.000000e+00> : vector<48x128xf32>
    %39 = tpu.matmul %38, %34, %cst_16 {dimension_numbers = #tpu.dot_dimension_numbers<[1], [0], [0], [1], [0, 0, 1, 1], [], []>} : vector<48x384xbf16>, vector<384x128xbf16>, vector<48x128xf32> -> vector<48x128xf32>
    %40 = vector.extract_strided_slice %0 {offsets = [2, 0], sizes = [1, 128], strides = [1, 1]} : vector<8x128xf32> to vector<1x128xf32>
    %41 = vector.broadcast %40 : vector<1x128xf32> to vector<48x128xf32>
    %42 = arith.addf %39, %41 : vector<48x128xf32>
    %cst_17 = arith.constant 0.00999999977 : f32
    %43 = vector.broadcast %cst_17 : f32 to vector<48x128xf32>
    %44 = arith.mulf %43, %42 : vector<48x128xf32>
    %45 = arith.maximumf %42, %44 : vector<48x128xf32>
    %c1152 = arith.constant 1152 : index
    %c0_18 = arith.constant 0 : index
    %46 = vector.load %arg2[%c1152, %c0_18] : memref<2560x128xbf16, #tpu.memory_space<vmem>>, vector<384x128xbf16>
    %c47_i32_19 = arith.constant 47 : i32
    %47 = tpu.dynamic_rotate %45 by %c47_i32_19 dim 0 : vector<48x128xf32>, i32 -> vector<48x128xf32>
    %c46_i32_20 = arith.constant 46 : i32
    %48 = tpu.dynamic_rotate %45 by %c46_i32_20 dim 0 : vector<48x128xf32>, i32 -> vector<48x128xf32>
    %49 = tpu.concatenate %45, %47, %48 in 1 : vector<48x128xf32>, vector<48x128xf32>, vector<48x128xf32> -> vector<48x384xf32>
    %50 = arith.truncf %49 : vector<48x384xf32> to vector<48x384xbf16>
    %cst_21 = arith.constant dense<0.000000e+00> : vector<48x128xf32>
    %51 = tpu.matmul %50, %46, %cst_21 {dimension_numbers = #tpu.dot_dimension_numbers<[1], [0], [0], [1], [0, 0, 1, 1], [], []>} : vector<48x384xbf16>, vector<384x128xbf16>, vector<48x128xf32> -> vector<48x128xf32>
    %52 = vector.extract_strided_slice %0 {offsets = [3, 0], sizes = [1, 128], strides = [1, 1]} : vector<8x128xf32> to vector<1x128xf32>
    %53 = vector.broadcast %52 : vector<1x128xf32> to vector<48x128xf32>
    %54 = arith.addf %51, %53 : vector<48x128xf32>
    %cst_22 = arith.constant 0.00999999977 : f32
    %55 = vector.broadcast %cst_22 : f32 to vector<48x128xf32>
    %56 = arith.mulf %55, %54 : vector<48x128xf32>
    %57 = arith.maximumf %54, %56 : vector<48x128xf32>
    %c1536 = arith.constant 1536 : index
    %c0_23 = arith.constant 0 : index
    %58 = vector.load %arg2[%c1536, %c0_23] : memref<2560x128xbf16, #tpu.memory_space<vmem>>, vector<384x128xbf16>
    %c47_i32_24 = arith.constant 47 : i32
    %59 = tpu.dynamic_rotate %57 by %c47_i32_24 dim 0 : vector<48x128xf32>, i32 -> vector<48x128xf32>
    %c46_i32_25 = arith.constant 46 : i32
    %60 = tpu.dynamic_rotate %57 by %c46_i32_25 dim 0 : vector<48x128xf32>, i32 -> vector<48x128xf32>
    %61 = tpu.concatenate %57, %59, %60 in 1 : vector<48x128xf32>, vector<48x128xf32>, vector<48x128xf32> -> vector<48x384xf32>
    %62 = arith.truncf %61 : vector<48x384xf32> to vector<48x384xbf16>
    %cst_26 = arith.constant dense<0.000000e+00> : vector<48x128xf32>
    %63 = tpu.matmul %62, %58, %cst_26 {dimension_numbers = #tpu.dot_dimension_numbers<[1], [0], [0], [1], [0, 0, 1, 1], [], []>} : vector<48x384xbf16>, vector<384x128xbf16>, vector<48x128xf32> -> vector<48x128xf32>
    %64 = vector.extract_strided_slice %0 {offsets = [4, 0], sizes = [1, 128], strides = [1, 1]} : vector<8x128xf32> to vector<1x128xf32>
    %65 = vector.broadcast %64 : vector<1x128xf32> to vector<48x128xf32>
    %66 = arith.addf %63, %65 : vector<48x128xf32>
    %cst_27 = arith.constant 0.00999999977 : f32
    %67 = vector.broadcast %cst_27 : f32 to vector<48x128xf32>
    %68 = arith.mulf %67, %66 : vector<48x128xf32>
    %69 = arith.maximumf %66, %68 : vector<48x128xf32>
    %c1920 = arith.constant 1920 : index
    %c0_28 = arith.constant 0 : index
    %70 = vector.load %arg2[%c1920, %c0_28] : memref<2560x128xbf16, #tpu.memory_space<vmem>>, vector<384x128xbf16>
    %c47_i32_29 = arith.constant 47 : i32
    %71 = tpu.dynamic_rotate %69 by %c47_i32_29 dim 0 : vector<48x128xf32>, i32 -> vector<48x128xf32>
    %c46_i32_30 = arith.constant 46 : i32
    %72 = tpu.dynamic_rotate %69 by %c46_i32_30 dim 0 : vector<48x128xf32>, i32 -> vector<48x128xf32>
    %73 = tpu.concatenate %69, %71, %72 in 1 : vector<48x128xf32>, vector<48x128xf32>, vector<48x128xf32> -> vector<48x384xf32>
    %74 = arith.truncf %73 : vector<48x384xf32> to vector<48x384xbf16>
    %cst_31 = arith.constant dense<0.000000e+00> : vector<48x128xf32>
    %75 = tpu.matmul %74, %70, %cst_31 {dimension_numbers = #tpu.dot_dimension_numbers<[1], [0], [0], [1], [0, 0, 1, 1], [], []>} : vector<48x384xbf16>, vector<384x128xbf16>, vector<48x128xf32> -> vector<48x128xf32>
    %76 = vector.extract_strided_slice %0 {offsets = [5, 0], sizes = [1, 128], strides = [1, 1]} : vector<8x128xf32> to vector<1x128xf32>
    %77 = vector.broadcast %76 : vector<1x128xf32> to vector<48x128xf32>
    %78 = arith.addf %75, %77 : vector<48x128xf32>
    %cst_32 = arith.constant 0.00999999977 : f32
    %79 = vector.broadcast %cst_32 : f32 to vector<48x128xf32>
    %80 = arith.mulf %79, %78 : vector<48x128xf32>
    %81 = arith.maximumf %78, %80 : vector<48x128xf32>
    %82 = vector.shape_cast %81 : vector<48x128xf32> to vector<2x24x128xf32>
    %83 = tpu.iota {dimensions = array<i32: 1>} : vector<2x24x128xi32>
    %c8_i32 = arith.constant 8 : i32
    %84 = vector.broadcast %c8_i32 : i32 to vector<2x24x128xi32>
    %85 = arith.cmpi slt, %83, %84 : vector<2x24x128xi32>
    %cst_33 = arith.constant -1.000000e+30 : f32
    %86 = vector.broadcast %cst_33 : f32 to vector<2x24x128xf32>
    %87 = arith.select %85, %82, %86 : vector<2x24x128xi1>, vector<2x24x128xf32>
    %cst_34 = arith.constant dense<0xFF800000> : vector<2x128xf32>
    %88 = vector.multi_reduction <maximumf>, %87, %cst_34 [1] : vector<2x24x128xf32> to vector<2x128xf32>
    %c2304 = arith.constant 2304 : index
    %c0_35 = arith.constant 0 : index
    %89 = vector.load %arg2[%c2304, %c0_35] : memref<2560x128xbf16, #tpu.memory_space<vmem>>, vector<128x128xbf16>
    %90 = arith.truncf %88 : vector<2x128xf32> to vector<2x128xbf16>
    %cst_36 = arith.constant dense<0.000000e+00> : vector<2x128xf32>
    %91 = tpu.matmul %90, %89, %cst_36 {dimension_numbers = #tpu.dot_dimension_numbers<[1], [0], [0], [1], [0, 0, 1, 1], [], []>} : vector<2x128xbf16>, vector<128x128xbf16>, vector<2x128xf32> -> vector<2x128xf32>
    %92 = vector.extract_strided_slice %0 {offsets = [6, 0], sizes = [1, 128], strides = [1, 1]} : vector<8x128xf32> to vector<1x128xf32>
    %93 = vector.broadcast %92 : vector<1x128xf32> to vector<2x128xf32>
    %94 = arith.addf %91, %93 : vector<2x128xf32>
    %95 = tpu.iota {dimensions = array<i32: 1>} : vector<2x128xi32>
    %c6_i32 = arith.constant 6 : i32
    %96 = vector.broadcast %c6_i32 : i32 to vector<2x128xi32>
    %97 = arith.cmpi slt, %95, %96 : vector<2x128xi32>
    %cst_37 = arith.constant -1.000000e+30 : f32
    %98 = vector.broadcast %cst_37 : f32 to vector<2x128xf32>
    %99 = arith.select %97, %94, %98 : vector<2x128xi1>, vector<2x128xf32>
    %cst_38 = arith.constant dense<0xFF800000> : vector<2xf32>
    %100 = vector.multi_reduction <maximumf>, %99, %cst_38 [1] : vector<2x128xf32> to vector<2xf32>
    %101 = vector.shape_cast %100 : vector<2xf32> to vector<2x1xf32>
    %102 = vector.broadcast %101 : vector<2x1xf32> to vector<2x128xf32>
    %103 = arith.subf %99, %102 : vector<2x128xf32>
    %104 = math.exp %103 : vector<2x128xf32>
    %cst_39 = arith.constant dense<0.000000e+00> : vector<2xf32>
    %105 = vector.multi_reduction <add>, %104, %cst_39 [1] : vector<2x128xf32> to vector<2xf32>
    %106 = vector.shape_cast %105 : vector<2xf32> to vector<2x1xf32>
    %107 = vector.broadcast %106 : vector<2x1xf32> to vector<2x128xf32>
    %108 = arith.divf %104, %107 : vector<2x128xf32>
    %c0_40 = arith.constant 0 : index
    %c0_41 = arith.constant 0 : index
    %109 = vector.load %arg4[%c0_40, %c0_41] : memref<2x128xf32, #tpu.memory_space<vmem>>, vector<2x128xf32>
    tpu.vector_store %arg4[%c0_40, %c0_41], %108 {strides = array<i32>} : memref<2x128xf32, #tpu.memory_space<vmem>>, vector<2x128xf32>,
    return
  }
  func.func @transform_0(%arg0: i32) -> (i32, i32) {
    %c0_i32 = arith.constant 0 : i32
    %c0_i32_0 = arith.constant 0 : i32
    return %arg0, %c0_i32 : i32, i32
  }
  func.func @transform_1(%arg0: i32) -> (i32, i32) {
    %c0_i32 = arith.constant 0 : i32
    %c0_i32_0 = arith.constant 0 : i32
    %c0_i32_1 = arith.constant 0 : i32
    return %c0_i32, %c0_i32_0 : i32, i32
  }
  func.func @transform_2(%arg0: i32) -> (i32, i32) {
    %c0_i32 = arith.constant 0 : i32
    %c0_i32_0 = arith.constant 0 : i32
    %c0_i32_1 = arith.constant 0 : i32
    return %c0_i32, %c0_i32_0 : i32, i32
  }
  func.func @transform_3(%arg0: i32) -> (i32, i32) {
    %c0_i32 = arith.constant 0 : i32
    %c0_i32_0 = arith.constant 0 : i32
    return %arg0, %c0_i32 : i32, i32
  }
}

</mosaic_0001>

<llo_original>
// kernel: conv_forward.1
$region0: #{conv_forward.1}
  #allocation0 [shape = 'u32[]', space=smem, size = 0x4, offset = 0x4, fixed_abs, tag = 'smem constant byte address 0x4 - core index']
  #allocation1 [shape = 'u32[144,128]{1,0:T(1,128)}', space=vmem, size = 0x12000, scoped, tag = 'internal scratch']
  %s0 = inlined_call_operand.vmem [shape: s32[48,1], index: 0, kind: input, shape index: {}]
  %s1 = inlined_call_operand.hbm [shape: bf16[2560,128], index: 1, kind: input, shape index: {}]
  %s2 = inlined_call_operand.vmem [shape: f32[8,128], index: 2, kind: input, shape index: {}]
  %s3 = inlined_call_operand.hbm [shape: f32[2,128], index: 3, kind: output, shape index: {}]
  %s4 = sld [smem:[#allocation0]]
  $region26: #{conv_forward.1} parent=0
    _
  %s6 = ssub.s32 1, %s4
  %s7 = scalar_select 0, %s6, %s4
  $region1: #{conv_forward.1} parent=0
    #allocation2 [shape = 'u8[655360]{0}', space=vmem, size = 0xa0000, scoped, tag = 'input window, operand 1, single buffered']
    #allocation3 [shape = 's32[1]{0}', space=sflag, size = 0x4, scoped, tag = 'scoped memory for conv_forward.1']
    #allocation4 [shape = 's32[1]{0}', space=sflag, size = 0x4, scoped, tag = 'scoped memory for conv_forward.1']
    #allocation5 [shape = 'u8[1024]{0}', space=vmem, size = 0x400, scoped, tag = 'output window, operand 0, single buffered']
    %8 = vsyncpa [#allocation3], 0
    %9 = vsyncpa [#allocation4], 0
    // Predicated region
    $region2: #{conv_forward.1} parent=1 // pred_check
      _
    $region3: #{conv_forward.1} parent=1 // pred_check_branch
      %11 = sbr.rel (0) target = $region5
    $region4: #{conv_forward.1} parent=1 // pred_region
      _
    $region5: #{conv_forward.1} parent=1 // pred_fallthru
      _
    // Predicated region
    $region6: #{conv_forward.1} parent=1 // pred_check
      _
    $region7: #{conv_forward.1} parent=1 // pred_check_branch
      %13 = sbr.rel (0) target = $region9
    $region8: #{conv_forward.1} parent=1 // pred_region
      %s15 = ssub.s32 20480, 20480
      %16 = vsyncadd [#allocation3], %s15
      %s17 = sshll.u32 [#allocation2], 4
      %s18 = int_to_ptr.vmem [resolvable:$true] %s17
      %23 = dma.hbm_to_vmem [thread:$0]  %s1, 20480, %s18, [#allocation3], 64, 64, 4
    $region9: #{conv_forward.1} parent=1 // pred_fallthru
      _
    // Predicated region
    $region10: #{conv_forward.1} parent=1 // pred_check
      _
    $region11: #{conv_forward.1} parent=1 // pred_check_branch
      %25 = sbr.rel (0) target = $region13
    $region12: #{conv_forward.1} parent=1 // pred_region
      _
    $region13: #{conv_forward.1} parent=1 // pred_fallthru
      _
    // Predicated region
    $region14: #{conv_forward.1} parent=1 // pred_check
      _
    $region15: #{conv_forward.1} parent=1 // pred_check_branch
      %27 = sbr.rel (0) target = $region17
    $region16: #{conv_forward.1} parent=1 // pred_region
      %28 = dma.done [#allocation3], 20480
    $region17: #{conv_forward.1} parent=1 // pred_fallthru
      _
    %v30 = vld [vmem:[%s2] sm:$0xff]
    %v31 = vld [vmem:[#allocation2 + $0x4c0] sm:$0xf]
    %v32 = vld [vmem:[#allocation2 + $0x4c4] sm:$0xf]
    %v33 = vld [vmem:[#allocation2 + $0x4c8] sm:$0xf]
    %v34 = vld [vmem:[#allocation2 + $0x4cc] sm:$0xf]
    %v35 = vld [vmem:[#allocation2 + $0x4d0] sm:$0xf]
    %v36 = vld [vmem:[#allocation2 + $0x4d4] sm:$0xf]
    %v37 = vld [vmem:[#allocation2 + $0x4d8] sm:$0xf]
    %v38 = vld [vmem:[#allocation2 + $0x4dc] sm:$0xf]
    %v39 = vld [vmem:[#allocation2 + $0x4e0] sm:$0xf]
    %v40 = vld [vmem:[#allocation2 + $0x4e4] sm:$0xf]
    %v41 = vld [vmem:[#allocation2 + $0x4e8] sm:$0xf]
    %v42 = vld [vmem:[#allocation2 + $0x4ec] sm:$0xf]
    %v43 = vld [vmem:[#allocation2 + $0x4f0] sm:$0xf]
    %v44 = vld [vmem:[#allocation2 + $0x4f4] sm:$0xf]
    %v45 = vld [vmem:[#allocation2 + $0x4f8] sm:$0xf]
    %v46 = vld [vmem:[#allocation2 + $0x4fc] sm:$0xf]
    %v47 = vld [vmem:[%s0] sm:$0xff]
    %v48 = vld [vmem:[%s0 + $0x8] sm:$0xff]
    %v49 = vld [vmem:[%s0 + $0x10] sm:$0xff]
    %v50 = vld [vmem:[%s0 + $0x18] sm:$0xff]
    %v51 = vld [vmem:[%s0 + $0x20] sm:$0xff]
    %v52 = vld [vmem:[%s0 + $0x28] sm:$0xff]
    %v53 = vlaneseq
    %v54 = vand.u32 %v53, 127
    %55 = vset.pattern.permute.xlu0 0
    %56 = vperm.xlu0 %55, %v47
    %v57 = vpop.permute.xlu0 %56
    %58 = vset.pattern.permute.xlu0 0
    %59 = vperm.xlu0 %58, %v48
    %v60 = vpop.permute.xlu0 %59
    %61 = vset.pattern.permute.xlu0 0
    %62 = vperm.xlu0 %61, %v49
    %v63 = vpop.permute.xlu0 %62
    %64 = vset.pattern.permute.xlu0 0
    %65 = vperm.xlu0 %64, %v50
    %v66 = vpop.permute.xlu0 %65
    %67 = vset.pattern.permute.xlu0 0
    %68 = vperm.xlu0 %67, %v51
    %v69 = vpop.permute.xlu0 %68
    %70 = vset.pattern.permute.xlu0 0
    %71 = vperm.xlu0 %70, %v52
    %v72 = vpop.permute.xlu0 %71
    %vm73 = vcmp.eq.s32.totalorder %v54, %v57
    %vm74 = vcmp.eq.s32.totalorder %v54, %v60
    %vm75 = vcmp.eq.s32.totalorder %v54, %v63
    %vm76 = vcmp.eq.s32.totalorder %v54, %v66
    %vm77 = vcmp.eq.s32.totalorder %v54, %v69
    %vm78 = vcmp.eq.s32.totalorder %v54, %v72
    %v79 = vsel %vm73, 1, 0
    %v80 = vsel %vm74, 1, 0
    %v81 = vsel %vm75, 1, 0
    %v82 = vsel %vm76, 1, 0
    %v83 = vsel %vm77, 1, 0
    %v84 = vsel %vm78, 1, 0
    %v85 = vcvt.s32.f32 %v79
    %v86 = vcvt.s32.f32 %v80
    %v87 = vcvt.s32.f32 %v81
    %v88 = vcvt.s32.f32 %v82
    %v89 = vcvt.s32.f32 %v83
    %v90 = vcvt.s32.f32 %v84
    %v91 = vpack.c.bf16 %v86, %v85
    %v92 = vpack.c.bf16 %v88, %v87
    %v93 = vpack.c.bf16 %v90, %v89
    %v110 = vunpack.c.l.b16 %v31
    %v111 = vunpack.c.l.b16 %v32
    %v112 = vunpack.c.l.b16 %v33
    %v113 = vunpack.c.l.b16 %v34
    %v114 = vunpack.c.l.b16 %v35
    %v115 = vunpack.c.l.b16 %v36
    %v116 = vunpack.c.l.b16 %v37
    %v117 = vunpack.c.l.b16 %v38
    %v118 = vunpack.c.l.b16 %v39
    %v119 = vunpack.c.l.b16 %v40
    %v120 = vunpack.c.l.b16 %v41
    %v121 = vunpack.c.l.b16 %v42
    %v122 = vunpack.c.l.b16 %v43
    %v123 = vunpack.c.l.b16 %v44
    %v124 = vunpack.c.l.b16 %v45
    %v125 = vunpack.c.l.b16 %v46
    %v126 = vpack.c.b16 %v111, %v110
    %v127 = vpack.c.b16 %v113, %v112
    %v128 = vpack.c.b16 %v115, %v114
    %v129 = vpack.c.b16 %v117, %v116
    %v130 = vpack.c.b16 %v119, %v118
    %v131 = vpack.c.b16 %v121, %v120
    %v132 = vpack.c.b16 %v123, %v122
    %v133 = vpack.c.b16 %v125, %v124
    %142 = vmatprep.subr.bf16.mxu0 0
    %143 = vmatpush1.bf16.msra.mxu0 %v133
    %144 = vmatprep.subr.bf16.mxu0 0
    %145 = vmatpush1.bf16.msra.mxu0 %v132
    %146 = vmatprep.subr.bf16.mxu0 0
    %147 = vmatpush1.bf16.msra.mxu0 %v131
    %148 = vmatprep.subr.bf16.mxu0 0
    %149 = vmatpush1.bf16.msra.mxu0 %v130
    %150 = vmatprep.subr.bf16.mxu0 0
    %151 = vmatpush1.bf16.msra.mxu0 %v129
    %152 = vmatprep.subr.bf16.mxu0 0
    %153 = vmatpush1.bf16.msra.mxu0 %v128
    %154 = vmatprep.subr.bf16.mxu0 0
    %155 = vmatpush1.bf16.msra.mxu0 %v127
    %156 = vmatprep.subr.bf16.mxu0 0
    %157 = vmatpush1.bf16.msra.mxu0 %v126
    %158 = vmatprep.subr.bf16.mxu0 0
    %159 = vmatpush2.bf16.msra.mxu0 0
    %160 = vmatprep.subr.bf16.mxu0 0
    %161 = vmatpush2.bf16.msra.mxu0 0
    %162 = vmatprep.subr.bf16.mxu0 0
    %163 = vmatpush2.bf16.msra.mxu0 0
    %164 = vmatprep.subr.bf16.mxu0 0
    %165 = vmatpush2.bf16.msra.mxu0 0
    %166 = vmatprep.subr.bf16.mxu0 0
    %167 = vmatpush2.bf16.msra.mxu0 0
    %168 = vmatprep.subr.bf16.mxu0 0
    %169 = vmatpush2.bf16.msra.mxu0 0
    %170 = vmatprep.subr.bf16.mxu0 0
    %171 = vmatpush2.bf16.msra.mxu0 0
    %172 = vmatprep.subr.bf16.mxu0 0
    %173 = vmatpush2.bf16.msra.mxu0 0
    %174 = vmatprep.mubr.bf16.mxu0 0
    %175 = vmatmul.mubr.bf16.gmra.mxu0 %v91
    %v176 = vpop.f32.mrf.mxu0
    %v177 = vadd.f32 0.0, %v176
    %v178 = vpop.f32.mrf.mxu0
    %v179 = vpop.f32.mrf.mxu0
    %v180 = vadd.f32 0.0, %v179
    %v181 = vpop.f32.mrf.mxu0
    %182 = vmatprep.mubr.bf16.mxu0 0
    %183 = vmatmul.mubr.bf16.gmra.mxu0 %v92
    %v184 = vpop.f32.mrf.mxu0
    %v185 = vadd.f32 0.0, %v184
    %v186 = vpop.f32.mrf.mxu0
    %v187 = vpop.f32.mrf.mxu0
    %v188 = vadd.f32 0.0, %v187
    %v189 = vpop.f32.mrf.mxu0
    %190 = vmatprep.mubr.bf16.mxu0 0
    %191 = vmatmul.mubr.bf16.gmra.mxu0 %v93
    %v192 = vpop.f32.mrf.mxu0
    %v193 = vadd.f32 0.0, %v192
    %v194 = vpop.f32.mrf.mxu0
    %v195 = vpop.f32.mrf.mxu0
    %v196 = vadd.f32 0.0, %v195
    %v197 = vpop.f32.mrf.mxu0
    %198 = vdwg.mxu0
    %v199 = vld [vmem:[#allocation2] sm:$0xf]
    %v200 = vld [vmem:[#allocation2 + $0x4] sm:$0xf]
    %v201 = vld [vmem:[#allocation2 + $0x8] sm:$0xf]
    %v202 = vld [vmem:[#allocation2 + $0xc] sm:$0xf]
    %v203 = vld [vmem:[#allocation2 + $0x10] sm:$0xf]
    %v204 = vld [vmem:[#allocation2 + $0x14] sm:$0xf]
    %v205 = vld [vmem:[#allocation2 + $0x18] sm:$0xf]
    %v206 = vld [vmem:[#allocation2 + $0x1c] sm:$0xf]
    %v207 = vld [vmem:[#allocation2 + $0x20] sm:$0xf]
    %v208 = vld [vmem:[#allocation2 + $0x24] sm:$0xf]
    %v209 = vld [vmem:[#allocation2 + $0x28] sm:$0xf]
    %v210 = vld [vmem:[#allocation2 + $0x2c] sm:$0xf]
    %v211 = vld [vmem:[#allocation2 + $0x30] sm:$0xf]
    %v212 = vld [vmem:[#allocation2 + $0x34] sm:$0xf]
    %v213 = vld [vmem:[#allocation2 + $0x38] sm:$0xf]
    %v214 = vld [vmem:[#allocation2 + $0x3c] sm:$0xf]
    %v215 = vld [vmem:[#allocation2 + $0x40] sm:$0xf]
    %v216 = vld [vmem:[#allocation2 + $0x44] sm:$0xf]
    %v217 = vld [vmem:[#allocation2 + $0x48] sm:$0xf]
    %v218 = vld [vmem:[#allocation2 + $0x4c] sm:$0xf]
    %v219 = vld [vmem:[#allocation2 + $0x50] sm:$0xf]
    %v220 = vld [vmem:[#allocation2 + $0x54] sm:$0xf]
    %v221 = vld [vmem:[#allocation2 + $0x58] sm:$0xf]
    %v222 = vld [vmem:[#allocation2 + $0x5c] sm:$0xf]
    %v223 = vld [vmem:[#allocation2 + $0x60] sm:$0xf]
    %v224 = vld [vmem:[#allocation2 + $0x64] sm:$0xf]
    %v225 = vld [vmem:[#allocation2 + $0x68] sm:$0xf]
    %v226 = vld [vmem:[#allocation2 + $0x6c] sm:$0xf]
    %v227 = vld [vmem:[#allocation2 + $0x70] sm:$0xf]
    %v228 = vld [vmem:[#allocation2 + $0x74] sm:$0xf]
    %v229 = vld [vmem:[#allocation2 + $0x78] sm:$0xf]
    %v230 = vld [vmem:[#allocation2 + $0x7c] sm:$0xf]
    %v231 = vld [vmem:[#allocation2 + $0x80] sm:$0xf]
    %v232 = vld [vmem:[#allocation2 + $0x84] sm:$0xf]
    %v233 = vld [vmem:[#allocation2 + $0x88] sm:$0xf]
    %v234 = vld [vmem:[#allocation2 + $0x8c] sm:$0xf]
    %v235 = vld [vmem:[#allocation2 + $0x90] sm:$0xf]
    %v236 = vld [vmem:[#allocation2 + $0x94] sm:$0xf]
    %v237 = vld [vmem:[#allocation2 + $0x98] sm:$0xf]
    %v238 = vld [vmem:[#allocation2 + $0x9c] sm:$0xf]
    %v239 = vld [vmem:[#allocation2 + $0xa0] sm:$0xf]
    %v240 = vld [vmem:[#allocation2 + $0xa4] sm:$0xf]
    %v241 = vld [vmem:[#allocation2 + $0xa8] sm:$0xf]
    %v242 = vld [vmem:[#allocation2 + $0xac] sm:$0xf]
    %v243 = vld [vmem:[#allocation2 + $0xb0] sm:$0xf]
    %v244 = vld [vmem:[#allocation2 + $0xb4] sm:$0xf]
    %v245 = vld [vmem:[#allocation2 + $0xb8] sm:$0xf]
    %v246 = vld [vmem:[#allocation2 + $0xbc] sm:$0xf]
    %v247 = vrot.slane %v177, 1
    %v248 = vrot.slane %v180, 1
    %v249 = vrot.slane %v185, 1
    %v250 = vrot.slane %v188, 1
    %v251 = vrot.slane %v193, 1
    %v252 = vrot.slane %v196, 1
    %v253 = vlaneseq
    %v254 = vshrl.u32 %v253, 7
    %vm255 = vcmp.lt.s32.totalorder %v254, 7
    %v256 = vsel %vm255, %v251, %v252
    %v257 = vsel %vm255, %v250, %v251
    %v258 = vsel %vm255, %v249, %v250
    %v259 = vsel %vm255, %v248, %v249
    %v260 = vsel %vm255, %v247, %v248
    %v261 = vsel %vm255, %v252, %v247
    %v262 = vrot.slane %v177, 2
    %v263 = vrot.slane %v180, 2
    %v264 = vrot.slane %v185, 2
    %v265 = vrot.slane %v188, 2
    %v266 = vrot.slane %v193, 2
    %v267 = vrot.slane %v196, 2
    %vm268 = vcmp.lt.s32.totalorder %v254, 6
    %v269 = vsel %vm268, %v266, %v267
    %v270 = vsel %vm268, %v265, %v266
    %v271 = vsel %vm268, %v264, %v265
    %v272 = vsel %vm268, %v263, %v264
    %v273 = vsel %vm268, %v262, %v263
    %v274 = vsel %vm268, %v267, %v262
    %v275 = vpack.c.bf16 %v180, %v177
    %v276 = vpack.c.bf16 %v259, %v260
    %v277 = vpack.c.bf16 %v272, %v273
    %v278 = vpack.c.bf16 %v188, %v185
    %v279 = vpack.c.bf16 %v257, %v258
    %v280 = vpack.c.bf16 %v270, %v271
    %v281 = vpack.c.bf16 %v196, %v193
    %v282 = vpack.c.bf16 %v261, %v256
    %v283 = vpack.c.bf16 %v274, %v269
    %v284 = vlaneseq
    %v285 = vshrl.u32 %v284, 7
    %v286 = vsub.s32 0, %v285
    %v287 = vrot.slane %v30, %v286
    %v336 = vunpack.c.l.b16 %v199
    %v337 = vunpack.c.l.b16 %v200
    %v338 = vunpack.c.l.b16 %v201
    %v339 = vunpack.c.l.b16 %v202
    %v340 = vunpack.c.l.b16 %v203
    %v341 = vunpack.c.l.b16 %v204
    %v342 = vunpack.c.l.b16 %v205
    %v343 = vunpack.c.l.b16 %v206
    %v344 = vunpack.c.l.b16 %v207
    %v345 = vunpack.c.l.b16 %v208
    %v346 = vunpack.c.l.b16 %v209
    %v347 = vunpack.c.l.b16 %v210
    %v348 = vunpack.c.l.b16 %v211
    %v349 = vunpack.c.l.b16 %v212
    %v350 = vunpack.c.l.b16 %v213
    %v351 = vunpack.c.l.b16 %v214
    %v352 = vunpack.c.l.b16 %v215
    %v353 = vunpack.c.l.b16 %v216
    %v354 = vunpack.c.l.b16 %v217
    %v355 = vunpack.c.l.b16 %v218
    %v356 = vunpack.c.l.b16 %v219
    %v357 = vunpack.c.l.b16 %v220
    %v358 = vunpack.c.l.b16 %v221
    %v359 = vunpack.c.l.b16 %v222
    %v360 = vunpack.c.l.b16 %v223
    %v361 = vunpack.c.l.b16 %v224
    %v362 = vunpack.c.l.b16 %v225
    %v363 = vunpack.c.l.b16 %v226
    %v364 = vunpack.c.l.b16 %v227
    %v365 = vunpack.c.l.b16 %v228
    %v366 = vunpack.c.l.b16 %v229
    %v367 = vunpack.c.l.b16 %v230
    %v368 = vunpack.c.l.b16 %v231
    %v369 = vunpack.c.l.b16 %v232
    %v370 = vunpack.c.l.b16 %v233
    %v371 = vunpack.c.l.b16 %v234
    %v372 = vunpack.c.l.b16 %v235
    %v373 = vunpack.c.l.b16 %v236
    %v374 = vunpack.c.l.b16 %v237
    %v375 = vunpack.c.l.b16 %v238
    %v376 = vunpack.c.l.b16 %v239
    %v377 = vunpack.c.l.b16 %v240
    %v378 = vunpack.c.l.b16 %v241
    %v379 = vunpack.c.l.b16 %v242
    %v380 = vunpack.c.l.b16 %v243
    %v381 = vunpack.c.l.b16 %v244
    %v382 = vunpack.c.l.b16 %v245
    %v383 = vunpack.c.l.b16 %v246
    %v384 = vpack.c.b16 %v337, %v336
    %v385 = vpack.c.b16 %v339, %v338
    %v386 = vpack.c.b16 %v341, %v340
    %v387 = vpack.c.b16 %v343, %v342
    %v388 = vpack.c.b16 %v345, %v344
    %v389 = vpack.c.b16 %v347, %v346
    %v390 = vpack.c.b16 %v349, %v348
    %v391 = vpack.c.b16 %v351, %v350
    %v392 = vpack.c.b16 %v353, %v352
    %v393 = vpack.c.b16 %v355, %v354
    %v394 = vpack.c.b16 %v357, %v356
    %v395 = vpack.c.b16 %v359, %v358
    %v396 = vpack.c.b16 %v361, %v360
    %v397 = vpack.c.b16 %v363, %v362
    %v398 = vpack.c.b16 %v365, %v364
    %v399 = vpack.c.b16 %v367, %v366
    %v400 = vpack.c.b16 %v369, %v368
    %v401 = vpack.c.b16 %v371, %v370
    %v402 = vpack.c.b16 %v373, %v372
    %v403 = vpack.c.b16 %v375, %v374
    %v404 = vpack.c.b16 %v377, %v376
    %v405 = vpack.c.b16 %v379, %v378
    %v406 = vpack.c.b16 %v381, %v380
    %v407 = vpack.c.b16 %v383, %v382
    %432 = vmatprep.subr.bf16.mxu0 0
    %433 = vmatpush1.bf16.msra.mxu0 %v391
    %434 = vmatprep.subr.bf16.mxu0 0
    %435 = vmatpush1.bf16.msra.mxu0 %v390
    %436 = vmatprep.subr.bf16.mxu0 0
    %437 = vmatpush1.bf16.msra.mxu0 %v389
    %438 = vmatprep.subr.bf16.mxu0 0
    %439 = vmatpush1.bf16.msra.mxu0 %v388
    %440 = vmatprep.subr.bf16.mxu0 0
    %441 = vmatpush1.bf16.msra.mxu0 %v387
    %442 = vmatprep.subr.bf16.mxu0 0
    %443 = vmatpush1.bf16.msra.mxu0 %v386
    %444 = vmatprep.subr.bf16.mxu0 0
    %445 = vmatpush1.bf16.msra.mxu0 %v385
    %446 = vmatprep.subr.bf16.mxu0 0
    %447 = vmatpush1.bf16.msra.mxu0 %v384
    %448 = vmatprep.subr.bf16.mxu0 0
    %449 = vmatpush2.bf16.msra.mxu0 %v399
    %450 = vmatprep.subr.bf16.mxu0 0
    %451 = vmatpush2.bf16.msra.mxu0 %v398
    %452 = vmatprep.subr.bf16.mxu0 0
    %453 = vmatpush2.bf16.msra.mxu0 %v397
    %454 = vmatprep.subr.bf16.mxu0 0
    %455 = vmatpush2.bf16.msra.mxu0 %v396
    %456 = vmatprep.subr.bf16.mxu0 0
    %457 = vmatpush2.bf16.msra.mxu0 %v395
    %458 = vmatprep.subr.bf16.mxu0 0
    %459 = vmatpush2.bf16.msra.mxu0 %v394
    %460 = vmatprep.subr.bf16.mxu0 0
    %461 = vmatpush2.bf16.msra.mxu0 %v393
    %462 = vmatprep.subr.bf16.mxu0 0
    %463 = vmatpush2.bf16.msra.mxu0 %v392
    %464 = vmatprep.mubr.bf16.mxu0 %v276
    %465 = vmatmul.mubr.bf16.gmra.mxu0 %v275
    %v466 = vpop.f32.mrf.mxu0
    %v467 = vadd.f32 %v287, %v466
    %v468 = vpop.f32.mrf.mxu0
    %v469 = vpop.f32.mrf.mxu0
    %v470 = vadd.f32 %v287, %v469
    %v471 = vpop.f32.mrf.mxu0
    %472 = vmatprep.mubr.bf16.mxu0 %v279
    %473 = vmatmul.mubr.bf16.gmra.mxu0 %v278
    %v474 = vpop.f32.mrf.mxu0
    %v475 = vadd.f32 %v287, %v474
    %v476 = vpop.f32.mrf.mxu0
    %v477 = vpop.f32.mrf.mxu0
    %v478 = vadd.f32 %v287, %v477
    %v479 = vpop.f32.mrf.mxu0
    %480 = vmatprep.mubr.bf16.mxu0 %v282
    %481 = vmatmul.mubr.bf16.gmra.mxu0 %v281
    %v482 = vpop.f32.mrf.mxu0
    %v483 = vadd.f32 %v287, %v482
    %v484 = vpop.f32.mrf.mxu0
    %v485 = vpop.f32.mrf.mxu0
    %v486 = vadd.f32 %v287, %v485
    %v487 = vpop.f32.mrf.mxu0
    %488 = vdwg.mxu0
    %489 = vmatprep.subr.bf16.mxu0 0
    %490 = vmatpush1.bf16.msra.mxu0 %v407
    %491 = vmatprep.subr.bf16.mxu0 0
    %492 = vmatpush1.bf16.msra.mxu0 %v406
    %493 = vmatprep.subr.bf16.mxu0 0
    %494 = vmatpush1.bf16.msra.mxu0 %v405
    %495 = vmatprep.subr.bf16.mxu0 0
    %496 = vmatpush1.bf16.msra.mxu0 %v404
    %497 = vmatprep.subr.bf16.mxu0 0
    %498 = vmatpush1.bf16.msra.mxu0 %v403
    %499 = vmatprep.subr.bf16.mxu0 0
    %500 = vmatpush1.bf16.msra.mxu0 %v402
    %501 = vmatprep.subr.bf16.mxu0 0
    %502 = vmatpush1.bf16.msra.mxu0 %v401
    %503 = vmatprep.subr.bf16.mxu0 0
    %504 = vmatpush1.bf16.msra.mxu0 %v400
    %505 = vmatprep.subr.bf16.mxu0 0
    %506 = vmatpush2.bf16.msra.mxu0 0
    %507 = vmatprep.subr.bf16.mxu0 0
    %508 = vmatpush2.bf16.msra.mxu0 0
    %509 = vmatprep.subr.bf16.mxu0 0
    %510 = vmatpush2.bf16.msra.mxu0 0
    %511 = vmatprep.subr.bf16.mxu0 0
    %512 = vmatpush2.bf16.msra.mxu0 0
    %513 = vmatprep.subr.bf16.mxu0 0
    %514 = vmatpush2.bf16.msra.mxu0 0
    %515 = vmatprep.subr.bf16.mxu0 0
    %516 = vmatpush2.bf16.msra.mxu0 0
    %517 = vmatprep.subr.bf16.mxu0 0
    %518 = vmatpush2.bf16.msra.mxu0 0
    %519 = vmatprep.subr.bf16.mxu0 0
    %520 = vmatpush2.bf16.msra.mxu0 0
    %521 = vmatprep.mubr.bf16.mxu0 0
    %522 = vmatmul.mubr.bf16.gmra.mxu0 %v277
    %v523 = vpop.f32.mrf.mxu0
    %v524 = vadd.f32 %v467, %v523
    %v525 = vpop.f32.mrf.mxu0
    %v526 = vpop.f32.mrf.mxu0
    %v527 = vadd.f32 %v470, %v526
    %v528 = vpop.f32.mrf.mxu0
    %529 = vmatprep.mubr.bf16.mxu0 0
    %530 = vmatmul.mubr.bf16.gmra.mxu0 %v280
    %v531 = vpop.f32.mrf.mxu0
    %v532 = vadd.f32 %v475, %v531
    %v533 = vpop.f32.mrf.mxu0
    %v534 = vpop.f32.mrf.mxu0
    %v535 = vadd.f32 %v478, %v534
    %v536 = vpop.f32.mrf.mxu0
    %537 = vmatprep.mubr.bf16.mxu0 0
    %538 = vmatmul.mubr.bf16.gmra.mxu0 %v283
    %v539 = vpop.f32.mrf.mxu0
    %v540 = vadd.f32 %v483, %v539
    %v541 = vpop.f32.mrf.mxu0
    %v542 = vpop.f32.mrf.mxu0
    %v543 = vadd.f32 %v486, %v542
    %v544 = vpop.f32.mrf.mxu0
    %545 = vdwg.mxu0
    %v546 = vmul.f32 %v524, 0.01
    %v547 = vmul.f32 %v527, 0.01
    %v548 = vmul.f32 %v532, 0.01
    %v549 = vmul.f32 %v535, 0.01
    %v550 = vmul.f32 %v540, 0.01
    %v551 = vmul.f32 %v543, 0.01
    %v552 = vmax.f32 %v524, %v546
    %v553 = vmax.f32 %v527, %v547
    %v554 = vmax.f32 %v532, %v548
    %v555 = vmax.f32 %v535, %v549
    %v556 = vmax.f32 %v540, %v550
    %v557 = vmax.f32 %v543, %v551
    %v558 = vld [vmem:[#allocation2 + $0xc0] sm:$0xf]
    %v559 = vld [vmem:[#allocation2 + $0xc4] sm:$0xf]
    %v560 = vld [vmem:[#allocation2 + $0xc8] sm:$0xf]
    %v561 = vld [vmem:[#allocation2 + $0xcc] sm:$0xf]
    %v562 = vld [vmem:[#allocation2 + $0xd0] sm:$0xf]
    %v563 = vld [vmem:[#allocation2 + $0xd4] sm:$0xf]
    %v564 = vld [vmem:[#allocation2 + $0xd8] sm:$0xf]
    %v565 = vld [vmem:[#allocation2 + $0xdc] sm:$0xf]
    %v566 = vld [vmem:[#allocation2 + $0xe0] sm:$0xf]
    %v567 = vld [vmem:[#allocation2 + $0xe4] sm:$0xf]
    %v568 = vld [vmem:[#allocation2 + $0xe8] sm:$0xf]
    %v569 = vld [vmem:[#allocation2 + $0xec] sm:$0xf]
    %v570 = vld [vmem:[#allocation2 + $0xf0] sm:$0xf]
    %v571 = vld [vmem:[#allocation2 + $0xf4] sm:$0xf]
    %v572 = vld [vmem:[#allocation2 + $0xf8] sm:$0xf]
    %v573 = vld [vmem:[#allocation2 + $0xfc] sm:$0xf]
    %v574 = vld [vmem:[#allocation2 + $0x100] sm:$0xf]
    %v575 = vld [vmem:[#allocation2 + $0x104] sm:$0xf]
    %v576 = vld [vmem:[#allocation2 + $0x108] sm:$0xf]
    %v577 = vld [vmem:[#allocation2 + $0x10c] sm:$0xf]
    %v578 = vld [vmem:[#allocation2 + $0x110] sm:$0xf]
    %v579 = vld [vmem:[#allocation2 + $0x114] sm:$0xf]
    %v580 = vld [vmem:[#allocation2 + $0x118] sm:$0xf]
    %v581 = vld [vmem:[#allocation2 + $0x11c] sm:$0xf]
    %v582 = vld [vmem:[#allocation2 + $0x120] sm:$0xf]
    %v583 = vld [vmem:[#allocation2 + $0x124] sm:$0xf]
    %v584 = vld [vmem:[#allocation2 + $0x128] sm:$0xf]
    %v585 = vld [vmem:[#allocation2 + $0x12c] sm:$0xf]
    %v586 = vld [vmem:[#allocation2 + $0x130] sm:$0xf]
    %v587 = vld [vmem:[#allocation2 + $0x134] sm:$0xf]
    %v588 = vld [vmem:[#allocation2 + $0x138] sm:$0xf]
    %v589 = vld [vmem:[#allocation2 + $0x13c] sm:$0xf]
    %v590 = vld [vmem:[#allocation2 + $0x140] sm:$0xf]
    %v591 = vld [vmem:[#allocation2 + $0x144] sm:$0xf]
    %v592 = vld [vmem:[#allocation2 + $0x148] sm:$0xf]
    %v593 = vld [vmem:[#allocation2 + $0x14c] sm:$0xf]
    %v594 = vld [vmem:[#allocation2 + $0x150] sm:$0xf]
    %v595 = vld [vmem:[#allocation2 + $0x154] sm:$0xf]
    %v596 = vld [vmem:[#allocation2 + $0x158] sm:$0xf]
    %v597 = vld [vmem:[#allocation2 + $0x15c] sm:$0xf]
    %v598 = vld [vmem:[#allocation2 + $0x160] sm:$0xf]
    %v599 = vld [vmem:[#allocation2 + $0x164] sm:$0xf]
    %v600 = vld [vmem:[#allocation2 + $0x168] sm:$0xf]
    %v601 = vld [vmem:[#allocation2 + $0x16c] sm:$0xf]
    %v602 = vld [vmem:[#allocation2 + $0x170] sm:$0xf]
    %v603 = vld [vmem:[#allocation2 + $0x174] sm:$0xf]
    %v604 = vld [vmem:[#allocation2 + $0x178] sm:$0xf]
    %v605 = vld [vmem:[#allocation2 + $0x17c] sm:$0xf]
    %v606 = vrot.slane %v552, 1
    %v607 = vrot.slane %v553, 1
    %v608 = vrot.slane %v554, 1
    %v609 = vrot.slane %v555, 1
    %v610 = vrot.slane %v556, 1
    %v611 = vrot.slane %v557, 1
    %v612 = vsel %vm255, %v610, %v611
    %v613 = vsel %vm255, %v609, %v610
    %v614 = vsel %vm255, %v608, %v609
    %v615 = vsel %vm255, %v607, %v608
    %v616 = vsel %vm255, %v606, %v607
    %v617 = vsel %vm255, %v611, %v606
    %v618 = vrot.slane %v552, 2
    %v619 = vrot.slane %v553, 2
    %v620 = vrot.slane %v554, 2
    %v621 = vrot.slane %v555, 2
    %v622 = vrot.slane %v556, 2
    %v623 = vrot.slane %v557, 2
    %v624 = vsel %vm268, %v622, %v623
    %v625 = vsel %vm268, %v621, %v622
    %v626 = vsel %vm268, %v620, %v621
    %v627 = vsel %vm268, %v619, %v620
    %v628 = vsel %vm268, %v618, %v619
    %v629 = vsel %vm268, %v623, %v618
    %v630 = vpack.c.bf16 %v553, %v552
    %v631 = vpack.c.bf16 %v615, %v616
    %v632 = vpack.c.bf16 %v627, %v628
    %v633 = vpack.c.bf16 %v555, %v554
    %v634 = vpack.c.bf16 %v613, %v614
    %v635 = vpack.c.bf16 %v625, %v626
    %v636 = vpack.c.bf16 %v557, %v556
    %v637 = vpack.c.bf16 %v617, %v612
    %v638 = vpack.c.bf16 %v629, %v624
    %v639 = vlaneseq
    %v640 = vshrl.u32 %v639, 7
    %v641 = vsub.s32 1, %v640
    %v642 = vrot.slane %v30, %v641
    %v691 = vunpack.c.l.b16 %v558
    %v692 = vunpack.c.l.b16 %v559
    %v693 = vunpack.c.l.b16 %v560
    %v694 = vunpack.c.l.b16 %v561
    %v695 = vunpack.c.l.b16 %v562
    %v696 = vunpack.c.l.b16 %v563
    %v697 = vunpack.c.l.b16 %v564
    %v698 = vunpack.c.l.b16 %v565
    %v699 = vunpack.c.l.b16 %v566
    %v700 = vunpack.c.l.b16 %v567
    %v701 = vunpack.c.l.b16 %v568
    %v702 = vunpack.c.l.b16 %v569
    %v703 = vunpack.c.l.b16 %v570
    %v704 = vunpack.c.l.b16 %v571
    %v705 = vunpack.c.l.b16 %v572
    %v706 = vunpack.c.l.b16 %v573
    %v707 = vunpack.c.l.b16 %v574
    %v708 = vunpack.c.l.b16 %v575
    %v709 = vunpack.c.l.b16 %v576
    %v710 = vunpack.c.l.b16 %v577
    %v711 = vunpack.c.l.b16 %v578
    %v712 = vunpack.c.l.b16 %v579
    %v713 = vunpack.c.l.b16 %v580
    %v714 = vunpack.c.l.b16 %v581
    %v715 = vunpack.c.l.b16 %v582
    %v716 = vunpack.c.l.b16 %v583
    %v717 = vunpack.c.l.b16 %v584
    %v718 = vunpack.c.l.b16 %v585
    %v719 = vunpack.c.l.b16 %v586
    %v720 = vunpack.c.l.b16 %v587
    %v721 = vunpack.c.l.b16 %v588
    %v722 = vunpack.c.l.b16 %v589
    %v723 = vunpack.c.l.b16 %v590
    %v724 = vunpack.c.l.b16 %v591
    %v725 = vunpack.c.l.b16 %v592
    %v726 = vunpack.c.l.b16 %v593
    %v727 = vunpack.c.l.b16 %v594
    %v728 = vunpack.c.l.b16 %v595
    %v729 = vunpack.c.l.b16 %v596
    %v730 = vunpack.c.l.b16 %v597
    %v731 = vunpack.c.l.b16 %v598
    %v732 = vunpack.c.l.b16 %v599
    %v733 = vunpack.c.l.b16 %v600
    %v734 = vunpack.c.l.b16 %v601
    %v735 = vunpack.c.l.b16 %v602
    %v736 = vunpack.c.l.b16 %v603
    %v737 = vunpack.c.l.b16 %v604
    %v738 = vunpack.c.l.b16 %v605
    %v739 = vpack.c.b16 %v692, %v691
    %v740 = vpack.c.b16 %v694, %v693
    %v741 = vpack.c.b16 %v696, %v695
    %v742 = vpack.c.b16 %v698, %v697
    %v743 = vpack.c.b16 %v700, %v699
    %v744 = vpack.c.b16 %v702, %v701
    %v745 = vpack.c.b16 %v704, %v703
    %v746 = vpack.c.b16 %v706, %v705
    %v747 = vpack.c.b16 %v708, %v707
    %v748 = vpack.c.b16 %v710, %v709
    %v749 = vpack.c.b16 %v712, %v711
    %v750 = vpack.c.b16 %v714, %v713
    %v751 = vpack.c.b16 %v716, %v715
    %v752 = vpack.c.b16 %v718, %v717
    %v753 = vpack.c.b16 %v720, %v719
    %v754 = vpack.c.b16 %v722, %v721
    %v755 = vpack.c.b16 %v724, %v723
    %v756 = vpack.c.b16 %v726, %v725
    %v757 = vpack.c.b16 %v728, %v727
    %v758 = vpack.c.b16 %v730, %v729
    %v759 = vpack.c.b16 %v732, %v731
    %v760 = vpack.c.b16 %v734, %v733
    %v761 = vpack.c.b16 %v736, %v735
    %v762 = vpack.c.b16 %v738, %v737
    %787 = vmatprep.subr.bf16.mxu0 0
    %788 = vmatpush1.bf16.msra.mxu0 %v746
    %789 = vmatprep.subr.bf16.mxu0 0
    %790 = vmatpush1.bf16.msra.mxu0 %v745
    %791 = vmatprep.subr.bf16.mxu0 0
    %792 = vmatpush1.bf16.msra.mxu0 %v744
    %793 = vmatprep.subr.bf16.mxu0 0
    %794 = vmatpush1.bf16.msra.mxu0 %v743
    %795 = vmatprep.subr.bf16.mxu0 0
    %796 = vmatpush1.bf16.msra.mxu0 %v742
    %797 = vmatprep.subr.bf16.mxu0 0
    %798 = vmatpush1.bf16.msra.mxu0 %v741
    %799 = vmatprep.subr.bf16.mxu0 0
    %800 = vmatpush1.bf16.msra.mxu0 %v740
    %801 = vmatprep.subr.bf16.mxu0 0
    %802 = vmatpush1.bf16.msra.mxu0 %v739
    %803 = vmatprep.subr.bf16.mxu0 0
    %804 = vmatpush2.bf16.msra.mxu0 %v754
    %805 = vmatprep.subr.bf16.mxu0 0
    %806 = vmatpush2.bf16.msra.mxu0 %v753
    %807 = vmatprep.subr.bf16.mxu0 0
    %808 = vmatpush2.bf16.msra.mxu0 %v752
    %809 = vmatprep.subr.bf16.mxu0 0
    %810 = vmatpush2.bf16.msra.mxu0 %v751
    %811 = vmatprep.subr.bf16.mxu0 0
    %812 = vmatpush2.bf16.msra.mxu0 %v750
    %813 = vmatprep.subr.bf16.mxu0 0
    %814 = vmatpush2.bf16.msra.mxu0 %v749
    %815 = vmatprep.subr.bf16.mxu0 0
    %816 = vmatpush2.bf16.msra.mxu0 %v748
    %817 = vmatprep.subr.bf16.mxu0 0
    %818 = vmatpush2.bf16.msra.mxu0 %v747
    %819 = vmatprep.mubr.bf16.mxu0 %v631
    %820 = vmatmul.mubr.bf16.gmra.mxu0 %v630
    %v821 = vpop.f32.mrf.mxu0
    %v822 = vadd.f32 %v642, %v821
    %v823 = vpop.f32.mrf.mxu0
    %v824 = vpop.f32.mrf.mxu0
    %v825 = vadd.f32 %v642, %v824
    %v826 = vpop.f32.mrf.mxu0
    %827 = vmatprep.mubr.bf16.mxu0 %v634
    %828 = vmatmul.mubr.bf16.gmra.mxu0 %v633
    %v829 = vpop.f32.mrf.mxu0
    %v830 = vadd.f32 %v642, %v829
    %v831 = vpop.f32.mrf.mxu0
    %v832 = vpop.f32.mrf.mxu0
    %v833 = vadd.f32 %v642, %v832
    %v834 = vpop.f32.mrf.mxu0
    %835 = vmatprep.mubr.bf16.mxu0 %v637
    %836 = vmatmul.mubr.bf16.gmra.mxu0 %v636
    %v837 = vpop.f32.mrf.mxu0
    %v838 = vadd.f32 %v642, %v837
    %v839 = vpop.f32.mrf.mxu0
    %v840 = vpop.f32.mrf.mxu0
    %v841 = vadd.f32 %v642, %v840
    %v842 = vpop.f32.mrf.mxu0
    %843 = vdwg.mxu0
    %844 = vmatprep.subr.bf16.mxu0 0
    %845 = vmatpush1.bf16.msra.mxu0 %v762
    %846 = vmatprep.subr.bf16.mxu0 0
    %847 = vmatpush1.bf16.msra.mxu0 %v761
    %848 = vmatprep.subr.bf16.mxu0 0
    %849 = vmatpush1.bf16.msra.mxu0 %v760
    %850 = vmatprep.subr.bf16.mxu0 0
    %851 = vmatpush1.bf16.msra.mxu0 %v759
    %852 = vmatprep.subr.bf16.mxu0 0
    %853 = vmatpush1.bf16.msra.mxu0 %v758
    %854 = vmatprep.subr.bf16.mxu0 0
    %855 = vmatpush1.bf16.msra.mxu0 %v757
    %856 = vmatprep.subr.bf16.mxu0 0
    %857 = vmatpush1.bf16.msra.mxu0 %v756
    %858 = vmatprep.subr.bf16.mxu0 0
    %859 = vmatpush1.bf16.msra.mxu0 %v755
    %860 = vmatprep.subr.bf16.mxu0 0
    %861 = vmatpush2.bf16.msra.mxu0 0
    %862 = vmatprep.subr.bf16.mxu0 0
    %863 = vmatpush2.bf16.msra.mxu0 0
    %864 = vmatprep.subr.bf16.mxu0 0
    %865 = vmatpush2.bf16.msra.mxu0 0
    %866 = vmatprep.subr.bf16.mxu0 0
    %867 = vmatpush2.bf16.msra.mxu0 0
    %868 = vmatprep.subr.bf16.mxu0 0
    %869 = vmatpush2.bf16.msra.mxu0 0
    %870 = vmatprep.subr.bf16.mxu0 0
    %871 = vmatpush2.bf16.msra.mxu0 0
    %872 = vmatprep.subr.bf16.mxu0 0
    %873 = vmatpush2.bf16.msra.mxu0 0
    %874 = vmatprep.subr.bf16.mxu0 0
    %875 = vmatpush2.bf16.msra.mxu0 0
    %876 = vmatprep.mubr.bf16.mxu0 0
    %877 = vmatmul.mubr.bf16.gmra.mxu0 %v632
    %v878 = vpop.f32.mrf.mxu0
    %v879 = vadd.f32 %v822, %v878
    %v880 = vpop.f32.mrf.mxu0
    %v881 = vpop.f32.mrf.mxu0
    %v882 = vadd.f32 %v825, %v881
    %v883 = vpop.f32.mrf.mxu0
    %884 = vmatprep.mubr.bf16.mxu0 0
    %885 = vmatmul.mubr.bf16.gmra.mxu0 %v635
    %v886 = vpop.f32.mrf.mxu0
    %v887 = vadd.f32 %v830, %v886
    %v888 = vpop.f32.mrf.mxu0
    %v889 = vpop.f32.mrf.mxu0
    %v890 = vadd.f32 %v833, %v889
    %v891 = vpop.f32.mrf.mxu0
    %892 = vmatprep.mubr.bf16.mxu0 0
    %893 = vmatmul.mubr.bf16.gmra.mxu0 %v638
    %v894 = vpop.f32.mrf.mxu0
    %v895 = vadd.f32 %v838, %v894
    %v896 = vpop.f32.mrf.mxu0
    %v897 = vpop.f32.mrf.mxu0
    %v898 = vadd.f32 %v841, %v897
    %v899 = vpop.f32.mrf.mxu0
    %900 = vdwg.mxu0
    %v901 = vmul.f32 %v879, 0.01
    %v902 = vmul.f32 %v882, 0.01
    %v903 = vmul.f32 %v887, 0.01
    %v904 = vmul.f32 %v890, 0.01
    %v905 = vmul.f32 %v895, 0.01
    %v906 = vmul.f32 %v898, 0.01
    %v907 = vmax.f32 %v879, %v901
    %v908 = vmax.f32 %v882, %v902
    %v909 = vmax.f32 %v887, %v903
    %v910 = vmax.f32 %v890, %v904
    %v911 = vmax.f32 %v895, %v905
    %v912 = vmax.f32 %v898, %v906
    %v913 = vld [vmem:[#allocation2 + $0x180] sm:$0xf]
    %v914 = vld [vmem:[#allocation2 + $0x184] sm:$0xf]
    %v915 = vld [vmem:[#allocation2 + $0x188] sm:$0xf]
    %v916 = vld [vmem:[#allocation2 + $0x18c] sm:$0xf]
    %v917 = vld [vmem:[#allocation2 + $0x190] sm:$0xf]
    %v918 = vld [vmem:[#allocation2 + $0x194] sm:$0xf]
    %v919 = vld [vmem:[#allocation2 + $0x198] sm:$0xf]
    %v920 = vld [vmem:[#allocation2 + $0x19c] sm:$0xf]
    %v921 = vld [vmem:[#allocation2 + $0x1a0] sm:$0xf]
    %v922 = vld [vmem:[#allocation2 + $0x1a4] sm:$0xf]
    %v923 = vld [vmem:[#allocation2 + $0x1a8] sm:$0xf]
    %v924 = vld [vmem:[#allocation2 + $0x1ac] sm:$0xf]
    %v925 = vld [vmem:[#allocation2 + $0x1b0] sm:$0xf]
    %v926 = vld [vmem:[#allocation2 + $0x1b4] sm:$0xf]
    %v927 = vld [vmem:[#allocation2 + $0x1b8] sm:$0xf]
    %v928 = vld [vmem:[#allocation2 + $0x1bc] sm:$0xf]
    %v929 = vld [vmem:[#allocation2 + $0x1c0] sm:$0xf]
    %v930 = vld [vmem:[#allocation2 + $0x1c4] sm:$0xf]
    %v931 = vld [vmem:[#allocation2 + $0x1c8] sm:$0xf]
    %v932 = vld [vmem:[#allocation2 + $0x1cc] sm:$0xf]
    %v933 = vld [vmem:[#allocation2 + $0x1d0] sm:$0xf]
    %v934 = vld [vmem:[#allocation2 + $0x1d4] sm:$0xf]
    %v935 = vld [vmem:[#allocation2 + $0x1d8] sm:$0xf]
    %v936 = vld [vmem:[#allocation2 + $0x1dc] sm:$0xf]
    %v937 = vld [vmem:[#allocation2 + $0x1e0] sm:$0xf]
    %v938 = vld [vmem:[#allocation2 + $0x1e4] sm:$0xf]
    %v939 = vld [vmem:[#allocation2 + $0x1e8] sm:$0xf]
    %v940 = vld [vmem:[#allocation2 + $0x1ec] sm:$0xf]
    %v941 = vld [vmem:[#allocation2 + $0x1f0] sm:$0xf]
    %v942 = vld [vmem:[#allocation2 + $0x1f4] sm:$0xf]
    %v943 = vld [vmem:[#allocation2 + $0x1f8] sm:$0xf]
    %v944 = vld [vmem:[#allocation2 + $0x1fc] sm:$0xf]
    %v945 = vld [vmem:[#allocation2 + $0x200] sm:$0xf]
    %v946 = vld [vmem:[#allocation2 + $0x204] sm:$0xf]
    %v947 = vld [vmem:[#allocation2 + $0x208] sm:$0xf]
    %v948 = vld [vmem:[#allocation2 + $0x20c] sm:$0xf]
    %v949 = vld [vmem:[#allocation2 + $0x210] sm:$0xf]
    %v950 = vld [vmem:[#allocation2 + $0x214] sm:$0xf]
    %v951 = vld [vmem:[#allocation2 + $0x218] sm:$0xf]
    %v952 = vld [vmem:[#allocation2 + $0x21c] sm:$0xf]
    %v953 = vld [vmem:[#allocation2 + $0x220] sm:$0xf]
    %v954 = vld [vmem:[#allocation2 + $0x224] sm:$0xf]
    %v955 = vld [vmem:[#allocation2 + $0x228] sm:$0xf]
    %v956 = vld [vmem:[#allocation2 + $0x22c] sm:$0xf]
    %v957 = vld [vmem:[#allocation2 + $0x230] sm:$0xf]
    %v958 = vld [vmem:[#allocation2 + $0x234] sm:$0xf]
    %v959 = vld [vmem:[#allocation2 + $0x238] sm:$0xf]
    %v960 = vld [vmem:[#allocation2 + $0x23c] sm:$0xf]
    %v961 = vrot.slane %v907, 1
    %v962 = vrot.slane %v908, 1
    %v963 = vrot.slane %v909, 1
    %v964 = vrot.slane %v910, 1
    %v965 = vrot.slane %v911, 1
    %v966 = vrot.slane %v912, 1
    %v967 = vsel %vm255, %v965, %v966
    %v968 = vsel %vm255, %v964, %v965
    %v969 = vsel %vm255, %v963, %v964
    %v970 = vsel %vm255, %v962, %v963
    %v971 = vsel %vm255, %v961, %v962
    %v972 = vsel %vm255, %v966, %v961
    %v973 = vrot.slane %v907, 2
    %v974 = vrot.slane %v908, 2
    %v975 = vrot.slane %v909, 2
    %v976 = vrot.slane %v910, 2
    %v977 = vrot.slane %v911, 2
    %v978 = vrot.slane %v912, 2
    %v979 = vsel %vm268, %v977, %v978
    %v980 = vsel %vm268, %v976, %v977
    %v981 = vsel %vm268, %v975, %v976
    %v982 = vsel %vm268, %v974, %v975
    %v983 = vsel %vm268, %v973, %v974
    %v984 = vsel %vm268, %v978, %v973
    %v985 = vpack.c.bf16 %v908, %v907
    %v986 = vpack.c.bf16 %v970, %v971
    %v987 = vpack.c.bf16 %v982, %v983
    %v988 = vpack.c.bf16 %v910, %v909
    %v989 = vpack.c.bf16 %v968, %v969
    %v990 = vpack.c.bf16 %v980, %v981
    %v991 = vpack.c.bf16 %v912, %v911
    %v992 = vpack.c.bf16 %v972, %v967
    %v993 = vpack.c.bf16 %v984, %v979
    %v994 = vlaneseq
    %v995 = vshrl.u32 %v994, 7
    %v996 = vsub.s32 2, %v995
    %v997 = vrot.slane %v30, %v996
    %v1046 = vunpack.c.l.b16 %v913
    %v1047 = vunpack.c.l.b16 %v914
    %v1048 = vunpack.c.l.b16 %v915
    %v1049 = vunpack.c.l.b16 %v916
    %v1050 = vunpack.c.l.b16 %v917
    %v1051 = vunpack.c.l.b16 %v918
    %v1052 = vunpack.c.l.b16 %v919
    %v1053 = vunpack.c.l.b16 %v920
    %v1054 = vunpack.c.l.b16 %v921
    %v1055 = vunpack.c.l.b16 %v922
    %v1056 = vunpack.c.l.b16 %v923
    %v1057 = vunpack.c.l.b16 %v924
    %v1058 = vunpack.c.l.b16 %v925
    %v1059 = vunpack.c.l.b16 %v926
    %v1060 = vunpack.c.l.b16 %v927
    %v1061 = vunpack.c.l.b16 %v928
    %v1062 = vunpack.c.l.b16 %v929
    %v1063 = vunpack.c.l.b16 %v930
    %v1064 = vunpack.c.l.b16 %v931
    %v1065 = vunpack.c.l.b16 %v932
    %v1066 = vunpack.c.l.b16 %v933
    %v1067 = vunpack.c.l.b16 %v934
    %v1068 = vunpack.c.l.b16 %v935
    %v1069 = vunpack.c.l.b16 %v936
    %v1070 = vunpack.c.l.b16 %v937
    %v1071 = vunpack.c.l.b16 %v938
    %v1072 = vunpack.c.l.b16 %v939
    %v1073 = vunpack.c.l.b16 %v940
    %v1074 = vunpack.c.l.b16 %v941
    %v1075 = vunpack.c.l.b16 %v942
    %v1076 = vunpack.c.l.b16 %v943
    %v1077 = vunpack.c.l.b16 %v944
    %v1078 = vunpack.c.l.b16 %v945
    %v1079 = vunpack.c.l.b16 %v946
    %v1080 = vunpack.c.l.b16 %v947
    %v1081 = vunpack.c.l.b16 %v948
    %v1082 = vunpack.c.l.b16 %v949
    %v1083 = vunpack.c.l.b16 %v950
    %v1084 = vunpack.c.l.b16 %v951
    %v1085 = vunpack.c.l.b16 %v952
    %v1086 = vunpack.c.l.b16 %v953
    %v1087 = vunpack.c.l.b16 %v954
    %v1088 = vunpack.c.l.b16 %v955
    %v1089 = vunpack.c.l.b16 %v956
    %v1090 = vunpack.c.l.b16 %v957
    %v1091 = vunpack.c.l.b16 %v958
    %v1092 = vunpack.c.l.b16 %v959
    %v1093 = vunpack.c.l.b16 %v960
    %v1094 = vpack.c.b16 %v1047, %v1046
    %v1095 = vpack.c.b16 %v1049, %v1048
    %v1096 = vpack.c.b16 %v1051, %v1050
    %v1097 = vpack.c.b16 %v1053, %v1052
    %v1098 = vpack.c.b16 %v1055, %v1054
    %v1099 = vpack.c.b16 %v1057, %v1056
    %v1100 = vpack.c.b16 %v1059, %v1058
    %v1101 = vpack.c.b16 %v1061, %v1060
    %v1102 = vpack.c.b16 %v1063, %v1062
    %v1103 = vpack.c.b16 %v1065, %v1064
    %v1104 = vpack.c.b16 %v1067, %v1066
    %v1105 = vpack.c.b16 %v1069, %v1068
    %v1106 = vpack.c.b16 %v1071, %v1070
    %v1107 = vpack.c.b16 %v1073, %v1072
    %v1108 = vpack.c.b16 %v1075, %v1074
    %v1109 = vpack.c.b16 %v1077, %v1076
    %v1110 = vpack.c.b16 %v1079, %v1078
    %v1111 = vpack.c.b16 %v1081, %v1080
    %v1112 = vpack.c.b16 %v1083, %v1082
    %v1113 = vpack.c.b16 %v1085, %v1084
    %v1114 = vpack.c.b16 %v1087, %v1086
    %v1115 = vpack.c.b16 %v1089, %v1088
    %v1116 = vpack.c.b16 %v1091, %v1090
    %v1117 = vpack.c.b16 %v1093, %v1092
    %1142 = vmatprep.subr.bf16.mxu0 0
    %1143 = vmatpush1.bf16.msra.mxu0 %v1101
    %1144 = vmatprep.subr.bf16.mxu0 0
    %1145 = vmatpush1.bf16.msra.mxu0 %v1100
    %1146 = vmatprep.subr.bf16.mxu0 0
    %1147 = vmatpush1.bf16.msra.mxu0 %v1099
    %1148 = vmatprep.subr.bf16.mxu0 0
    %1149 = vmatpush1.bf16.msra.mxu0 %v1098
    %1150 = vmatprep.subr.bf16.mxu0 0
    %1151 = vmatpush1.bf16.msra.mxu0 %v1097
    %1152 = vmatprep.subr.bf16.mxu0 0
    %1153 = vmatpush1.bf16.msra.mxu0 %v1096
    %1154 = vmatprep.subr.bf16.mxu0 0
    %1155 = vmatpush1.bf16.msra.mxu0 %v1095
    %1156 = vmatprep.subr.bf16.mxu0 0
    %1157 = vmatpush1.bf16.msra.mxu0 %v1094
    %1158 = vmatprep.subr.bf16.mxu0 0
    %1159 = vmatpush2.bf16.msra.mxu0 %v1109
    %1160 = vmatprep.subr.bf16.mxu0 0
    %1161 = vmatpush2.bf16.msra.mxu0 %v1108
    %1162 = vmatprep.subr.bf16.mxu0 0
    %1163 = vmatpush2.bf16.msra.mxu0 %v1107
    %1164 = vmatprep.subr.bf16.mxu0 0
    %1165 = vmatpush2.bf16.msra.mxu0 %v1106
    %1166 = vmatprep.subr.bf16.mxu0 0
    %1167 = vmatpush2.bf16.msra.mxu0 %v1105
    %1168 = vmatprep.subr.bf16.mxu0 0
    %1169 = vmatpush2.bf16.msra.mxu0 %v1104
    %1170 = vmatprep.subr.bf16.mxu0 0
    %1171 = vmatpush2.bf16.msra.mxu0 %v1103
    %1172 = vmatprep.subr.bf16.mxu0 0
    %1173 = vmatpush2.bf16.msra.mxu0 %v1102
    %1174 = vmatprep.mubr.bf16.mxu0 %v986
    %1175 = vmatmul.mubr.bf16.gmra.mxu0 %v985
    %v1176 = vpop.f32.mrf.mxu0
    %v1177 = vadd.f32 %v997, %v1176
    %v1178 = vpop.f32.mrf.mxu0
    %v1179 = vpop.f32.mrf.mxu0
    %v1180 = vadd.f32 %v997, %v1179
    %v1181 = vpop.f32.mrf.mxu0
    %1182 = vmatprep.mubr.bf16.mxu0 %v989
    %1183 = vmatmul.mubr.bf16.gmra.mxu0 %v988
    %v1184 = vpop.f32.mrf.mxu0
    %v1185 = vadd.f32 %v997, %v1184
    %v1186 = vpop.f32.mrf.mxu0
    %v1187 = vpop.f32.mrf.mxu0
    %v1188 = vadd.f32 %v997, %v1187
    %v1189 = vpop.f32.mrf.mxu0
    %1190 = vmatprep.mubr.bf16.mxu0 %v992
    %1191 = vmatmul.mubr.bf16.gmra.mxu0 %v991
    %v1192 = vpop.f32.mrf.mxu0
    %v1193 = vadd.f32 %v997, %v1192
    %v1194 = vpop.f32.mrf.mxu0
    %v1195 = vpop.f32.mrf.mxu0
    %v1196 = vadd.f32 %v997, %v1195
    %v1197 = vpop.f32.mrf.mxu0
    %1198 = vdwg.mxu0
    %1199 = vmatprep.subr.bf16.mxu0 0
    %1200 = vmatpush1.bf16.msra.mxu0 %v1117
    %1201 = vmatprep.subr.bf16.mxu0 0
    %1202 = vmatpush1.bf16.msra.mxu0 %v1116
    %1203 = vmatprep.subr.bf16.mxu0 0
    %1204 = vmatpush1.bf16.msra.mxu0 %v1115
    %1205 = vmatprep.subr.bf16.mxu0 0
    %1206 = vmatpush1.bf16.msra.mxu0 %v1114
    %1207 = vmatprep.subr.bf16.mxu0 0
    %1208 = vmatpush1.bf16.msra.mxu0 %v1113
    %1209 = vmatprep.subr.bf16.mxu0 0
    %1210 = vmatpush1.bf16.msra.mxu0 %v1112
    %1211 = vmatprep.subr.bf16.mxu0 0
    %1212 = vmatpush1.bf16.msra.mxu0 %v1111
    %1213 = vmatprep.subr.bf16.mxu0 0
    %1214 = vmatpush1.bf16.msra.mxu0 %v1110
    %1215 = vmatprep.subr.bf16.mxu0 0
    %1216 = vmatpush2.bf16.msra.mxu0 0
    %1217 = vmatprep.subr.bf16.mxu0 0
    %1218 = vmatpush2.bf16.msra.mxu0 0
    %1219 = vmatprep.subr.bf16.mxu0 0
    %1220 = vmatpush2.bf16.msra.mxu0 0
    %1221 = vmatprep.subr.bf16.mxu0 0
    %1222 = vmatpush2.bf16.msra.mxu0 0
    %1223 = vmatprep.subr.bf16.mxu0 0
    %1224 = vmatpush2.bf16.msra.mxu0 0
    %1225 = vmatprep.subr.bf16.mxu0 0
    %1226 = vmatpush2.bf16.msra.mxu0 0
    %1227 = vmatprep.subr.bf16.mxu0 0
    %1228 = vmatpush2.bf16.msra.mxu0 0
    %1229 = vmatprep.subr.bf16.mxu0 0
    %1230 = vmatpush2.bf16.msra.mxu0 0
    %1231 = vmatprep.mubr.bf16.mxu0 0
    %1232 = vmatmul.mubr.bf16.gmra.mxu0 %v987
    %v1233 = vpop.f32.mrf.mxu0
    %v1234 = vadd.f32 %v1177, %v1233
    %v1235 = vpop.f32.mrf.mxu0
    %v1236 = vpop.f32.mrf.mxu0
    %v1237 = vadd.f32 %v1180, %v1236
    %v1238 = vpop.f32.mrf.mxu0
    %1239 = vmatprep.mubr.bf16.mxu0 0
    %1240 = vmatmul.mubr.bf16.gmra.mxu0 %v990
    %v1241 = vpop.f32.mrf.mxu0
    %v1242 = vadd.f32 %v1185, %v1241
    %v1243 = vpop.f32.mrf.mxu0
    %v1244 = vpop.f32.mrf.mxu0
    %v1245 = vadd.f32 %v1188, %v1244
    %v1246 = vpop.f32.mrf.mxu0
    %1247 = vmatprep.mubr.bf16.mxu0 0
    %1248 = vmatmul.mubr.bf16.gmra.mxu0 %v993
    %v1249 = vpop.f32.mrf.mxu0
    %v1250 = vadd.f32 %v1193, %v1249
    %v1251 = vpop.f32.mrf.mxu0
    %v1252 = vpop.f32.mrf.mxu0
    %v1253 = vadd.f32 %v1196, %v1252
    %v1254 = vpop.f32.mrf.mxu0
    %1255 = vdwg.mxu0
    %v1256 = vmul.f32 %v1234, 0.01
    %v1257 = vmul.f32 %v1237, 0.01
    %v1258 = vmul.f32 %v1242, 0.01
    %v1259 = vmul.f32 %v1245, 0.01
    %v1260 = vmul.f32 %v1250, 0.01
    %v1261 = vmul.f32 %v1253, 0.01
    %v1262 = vmax.f32 %v1234, %v1256
    %v1263 = vmax.f32 %v1237, %v1257
    %v1264 = vmax.f32 %v1242, %v1258
    %v1265 = vmax.f32 %v1245, %v1259
    %v1266 = vmax.f32 %v1250, %v1260
    %v1267 = vmax.f32 %v1253, %v1261
    %v1268 = vld [vmem:[#allocation2 + $0x240] sm:$0xf]
    %v1269 = vld [vmem:[#allocation2 + $0x244] sm:$0xf]
    %v1270 = vld [vmem:[#allocation2 + $0x248] sm:$0xf]
    %v1271 = vld [vmem:[#allocation2 + $0x24c] sm:$0xf]
    %v1272 = vld [vmem:[#allocation2 + $0x250] sm:$0xf]
    %v1273 = vld [vmem:[#allocation2 + $0x254] sm:$0xf]
    %v1274 = vld [vmem:[#allocation2 + $0x258] sm:$0xf]
    %v1275 = vld [vmem:[#allocation2 + $0x25c] sm:$0xf]
    %v1276 = vld [vmem:[#allocation2 + $0x260] sm:$0xf]
    %v1277 = vld [vmem:[#allocation2 + $0x264] sm:$0xf]
    %v1278 = vld [vmem:[#allocation2 + $0x268] sm:$0xf]
    %v1279 = vld [vmem:[#allocation2 + $0x26c] sm:$0xf]
    %v1280 = vld [vmem:[#allocation2 + $0x270] sm:$0xf]
    %v1281 = vld [vmem:[#allocation2 + $0x274] sm:$0xf]
    %v1282 = vld [vmem:[#allocation2 + $0x278] sm:$0xf]
    %v1283 = vld [vmem:[#allocation2 + $0x27c] sm:$0xf]
    %v1284 = vld [vmem:[#allocation2 + $0x280] sm:$0xf]
    %v1285 = vld [vmem:[#allocation2 + $0x284] sm:$0xf]
    %v1286 = vld [vmem:[#allocation2 + $0x288] sm:$0xf]
    %v1287 = vld [vmem:[#allocation2 + $0x28c] sm:$0xf]
    %v1288 = vld [vmem:[#allocation2 + $0x290] sm:$0xf]
    %v1289 = vld [vmem:[#allocation2 + $0x294] sm:$0xf]
    %v1290 = vld [vmem:[#allocation2 + $0x298] sm:$0xf]
    %v1291 = vld [vmem:[#allocation2 + $0x29c] sm:$0xf]
    %v1292 = vld [vmem:[#allocation2 + $0x2a0] sm:$0xf]
    %v1293 = vld [vmem:[#allocation2 + $0x2a4] sm:$0xf]
    %v1294 = vld [vmem:[#allocation2 + $0x2a8] sm:$0xf]
    %v1295 = vld [vmem:[#allocation2 + $0x2ac] sm:$0xf]
    %v1296 = vld [vmem:[#allocation2 + $0x2b0] sm:$0xf]
    %v1297 = vld [vmem:[#allocation2 + $0x2b4] sm:$0xf]
    %v1298 = vld [vmem:[#allocation2 + $0x2b8] sm:$0xf]
    %v1299 = vld [vmem:[#allocation2 + $0x2bc] sm:$0xf]
    %v1300 = vld [vmem:[#allocation2 + $0x2c0] sm:$0xf]
    %v1301 = vld [vmem:[#allocation2 + $0x2c4] sm:$0xf]
    %v1302 = vld [vmem:[#allocation2 + $0x2c8] sm:$0xf]
    %v1303 = vld [vmem:[#allocation2 + $0x2cc] sm:$0xf]
    %v1304 = vld [vmem:[#allocation2 + $0x2d0] sm:$0xf]
    %v1305 = vld [vmem:[#allocation2 + $0x2d4] sm:$0xf]
    %v1306 = vld [vmem:[#allocation2 + $0x2d8] sm:$0xf]
    %v1307 = vld [vmem:[#allocation2 + $0x2dc] sm:$0xf]
    %v1308 = vld [vmem:[#allocation2 + $0x2e0] sm:$0xf]
    %v1309 = vld [vmem:[#allocation2 + $0x2e4] sm:$0xf]
    %v1310 = vld [vmem:[#allocation2 + $0x2e8] sm:$0xf]
    %v1311 = vld [vmem:[#allocation2 + $0x2ec] sm:$0xf]
    %v1312 = vld [vmem:[#allocation2 + $0x2f0] sm:$0xf]
    %v1313 = vld [vmem:[#allocation2 + $0x2f4] sm:$0xf]
    %v1314 = vld [vmem:[#allocation2 + $0x2f8] sm:$0xf]
    %v1315 = vld [vmem:[#allocation2 + $0x2fc] sm:$0xf]
    %v1316 = vrot.slane %v1262, 1
    %v1317 = vrot.slane %v1263, 1
    %v1318 = vrot.slane %v1264, 1
    %v1319 = vrot.slane %v1265, 1
    %v1320 = vrot.slane %v1266, 1
    %v1321 = vrot.slane %v1267, 1
    %v1322 = vsel %vm255, %v1320, %v1321
    %v1323 = vsel %vm255, %v1319, %v1320
    %v1324 = vsel %vm255, %v1318, %v1319
    %v1325 = vsel %vm255, %v1317, %v1318
    %v1326 = vsel %vm255, %v1316, %v1317
    %v1327 = vsel %vm255, %v1321, %v1316
    %v1328 = vrot.slane %v1262, 2
    %v1329 = vrot.slane %v1263, 2
    %v1330 = vrot.slane %v1264, 2
    %v1331 = vrot.slane %v1265, 2
    %v1332 = vrot.slane %v1266, 2
    %v1333 = vrot.slane %v1267, 2
    %v1334 = vsel %vm268, %v1332, %v1333
    %v1335 = vsel %vm268, %v1331, %v1332
    %v1336 = vsel %vm268, %v1330, %v1331
    %v1337 = vsel %vm268, %v1329, %v1330
    %v1338 = vsel %vm268, %v1328, %v1329
    %v1339 = vsel %vm268, %v1333, %v1328
    %v1340 = vpack.c.bf16 %v1263, %v1262
    %v1341 = vpack.c.bf16 %v1325, %v1326
    %v1342 = vpack.c.bf16 %v1337, %v1338
    %v1343 = vpack.c.bf16 %v1265, %v1264
    %v1344 = vpack.c.bf16 %v1323, %v1324
    %v1345 = vpack.c.bf16 %v1335, %v1336
    %v1346 = vpack.c.bf16 %v1267, %v1266
    %v1347 = vpack.c.bf16 %v1327, %v1322
    %v1348 = vpack.c.bf16 %v1339, %v1334
    %v1349 = vlaneseq
    %v1350 = vshrl.u32 %v1349, 7
    %v1351 = vsub.s32 3, %v1350
    %v1352 = vrot.slane %v30, %v1351
    %v1401 = vunpack.c.l.b16 %v1268
    %v1402 = vunpack.c.l.b16 %v1269
    %v1403 = vunpack.c.l.b16 %v1270
    %v1404 = vunpack.c.l.b16 %v1271
    %v1405 = vunpack.c.l.b16 %v1272
    %v1406 = vunpack.c.l.b16 %v1273
    %v1407 = vunpack.c.l.b16 %v1274
    %v1408 = vunpack.c.l.b16 %v1275
    %v1409 = vunpack.c.l.b16 %v1276
    %v1410 = vunpack.c.l.b16 %v1277
    %v1411 = vunpack.c.l.b16 %v1278
    %v1412 = vunpack.c.l.b16 %v1279
    %v1413 = vunpack.c.l.b16 %v1280
    %v1414 = vunpack.c.l.b16 %v1281
    %v1415 = vunpack.c.l.b16 %v1282
    %v1416 = vunpack.c.l.b16 %v1283
    %v1417 = vunpack.c.l.b16 %v1284
    %v1418 = vunpack.c.l.b16 %v1285
    %v1419 = vunpack.c.l.b16 %v1286
    %v1420 = vunpack.c.l.b16 %v1287
    %v1421 = vunpack.c.l.b16 %v1288
    %v1422 = vunpack.c.l.b16 %v1289
    %v1423 = vunpack.c.l.b16 %v1290
    %v1424 = vunpack.c.l.b16 %v1291
    %v1425 = vunpack.c.l.b16 %v1292
    %v1426 = vunpack.c.l.b16 %v1293
    %v1427 = vunpack.c.l.b16 %v1294
    %v1428 = vunpack.c.l.b16 %v1295
    %v1429 = vunpack.c.l.b16 %v1296
    %v1430 = vunpack.c.l.b16 %v1297
    %v1431 = vunpack.c.l.b16 %v1298
    %v1432 = vunpack.c.l.b16 %v1299
    %v1433 = vunpack.c.l.b16 %v1300
    %v1434 = vunpack.c.l.b16 %v1301
    %v1435 = vunpack.c.l.b16 %v1302
    %v1436 = vunpack.c.l.b16 %v1303
    %v1437 = vunpack.c.l.b16 %v1304
    %v1438 = vunpack.c.l.b16 %v1305
    %v1439 = vunpack.c.l.b16 %v1306
    %v1440 = vunpack.c.l.b16 %v1307
    %v1441 = vunpack.c.l.b16 %v1308
    %v1442 = vunpack.c.l.b16 %v1309
    %v1443 = vunpack.c.l.b16 %v1310
    %v1444 = vunpack.c.l.b16 %v1311
    %v1445 = vunpack.c.l.b16 %v1312
    %v1446 = vunpack.c.l.b16 %v1313
    %v1447 = vunpack.c.l.b16 %v1314
    %v1448 = vunpack.c.l.b16 %v1315
    %v1449 = vpack.c.b16 %v1402, %v1401
    %v1450 = vpack.c.b16 %v1404, %v1403
    %v1451 = vpack.c.b16 %v1406, %v1405
    %v1452 = vpack.c.b16 %v1408, %v1407
    %v1453 = vpack.c.b16 %v1410, %v1409
    %v1454 = vpack.c.b16 %v1412, %v1411
    %v1455 = vpack.c.b16 %v1414, %v1413
    %v1456 = vpack.c.b16 %v1416, %v1415
    %v1457 = vpack.c.b16 %v1418, %v1417
    %v1458 = vpack.c.b16 %v1420, %v1419
    %v1459 = vpack.c.b16 %v1422, %v1421
    %v1460 = vpack.c.b16 %v1424, %v1423
    %v1461 = vpack.c.b16 %v1426, %v1425
    %v1462 = vpack.c.b16 %v1428, %v1427
    %v1463 = vpack.c.b16 %v1430, %v1429
    %v1464 = vpack.c.b16 %v1432, %v1431
    %v1465 = vpack.c.b16 %v1434, %v1433
    %v1466 = vpack.c.b16 %v1436, %v1435
    %v1467 = vpack.c.b16 %v1438, %v1437
    %v1468 = vpack.c.b16 %v1440, %v1439
    %v1469 = vpack.c.b16 %v1442, %v1441
    %v1470 = vpack.c.b16 %v1444, %v1443
    %v1471 = vpack.c.b16 %v1446, %v1445
    %v1472 = vpack.c.b16 %v1448, %v1447
    %1497 = vmatprep.subr.bf16.mxu0 0
    %1498 = vmatpush1.bf16.msra.mxu0 %v1456
    %1499 = vmatprep.subr.bf16.mxu0 0
    %1500 = vmatpush1.bf16.msra.mxu0 %v1455
    %1501 = vmatprep.subr.bf16.mxu0 0
    %1502 = vmatpush1.bf16.msra.mxu0 %v1454
    %1503 = vmatprep.subr.bf16.mxu0 0
    %1504 = vmatpush1.bf16.msra.mxu0 %v1453
    %1505 = vmatprep.subr.bf16.mxu0 0
    %1506 = vmatpush1.bf16.msra.mxu0 %v1452
    %1507 = vmatprep.subr.bf16.mxu0 0
    %1508 = vmatpush1.bf16.msra.mxu0 %v1451
    %1509 = vmatprep.subr.bf16.mxu0 0
    %1510 = vmatpush1.bf16.msra.mxu0 %v1450
    %1511 = vmatprep.subr.bf16.mxu0 0
    %1512 = vmatpush1.bf16.msra.mxu0 %v1449
    %1513 = vmatprep.subr.bf16.mxu0 0
    %1514 = vmatpush2.bf16.msra.mxu0 %v1464
    %1515 = vmatprep.subr.bf16.mxu0 0
    %1516 = vmatpush2.bf16.msra.mxu0 %v1463
    %1517 = vmatprep.subr.bf16.mxu0 0
    %1518 = vmatpush2.bf16.msra.mxu0 %v1462
    %1519 = vmatprep.subr.bf16.mxu0 0
    %1520 = vmatpush2.bf16.msra.mxu0 %v1461
    %1521 = vmatprep.subr.bf16.mxu0 0
    %1522 = vmatpush2.bf16.msra.mxu0 %v1460
    %1523 = vmatprep.subr.bf16.mxu0 0
    %1524 = vmatpush2.bf16.msra.mxu0 %v1459
    %1525 = vmatprep.subr.bf16.mxu0 0
    %1526 = vmatpush2.bf16.msra.mxu0 %v1458
    %1527 = vmatprep.subr.bf16.mxu0 0
    %1528 = vmatpush2.bf16.msra.mxu0 %v1457
    %1529 = vmatprep.mubr.bf16.mxu0 %v1341
    %1530 = vmatmul.mubr.bf16.gmra.mxu0 %v1340
    %v1531 = vpop.f32.mrf.mxu0
    %v1532 = vadd.f32 %v1352, %v1531
    %v1533 = vpop.f32.mrf.mxu0
    %v1534 = vpop.f32.mrf.mxu0
    %v1535 = vadd.f32 %v1352, %v1534
    %v1536 = vpop.f32.mrf.mxu0
    %1537 = vmatprep.mubr.bf16.mxu0 %v1344
    %1538 = vmatmul.mubr.bf16.gmra.mxu0 %v1343
    %v1539 = vpop.f32.mrf.mxu0
    %v1540 = vadd.f32 %v1352, %v1539
    %v1541 = vpop.f32.mrf.mxu0
    %v1542 = vpop.f32.mrf.mxu0
    %v1543 = vadd.f32 %v1352, %v1542
    %v1544 = vpop.f32.mrf.mxu0
    %1545 = vmatprep.mubr.bf16.mxu0 %v1347
    %1546 = vmatmul.mubr.bf16.gmra.mxu0 %v1346
    %v1547 = vpop.f32.mrf.mxu0
    %v1548 = vadd.f32 %v1352, %v1547
    %v1549 = vpop.f32.mrf.mxu0
    %v1550 = vpop.f32.mrf.mxu0
    %v1551 = vadd.f32 %v1352, %v1550
    %v1552 = vpop.f32.mrf.mxu0
    %1553 = vdwg.mxu0
    %1554 = vmatprep.subr.bf16.mxu0 0
    %1555 = vmatpush1.bf16.msra.mxu0 %v1472
    %1556 = vmatprep.subr.bf16.mxu0 0
    %1557 = vmatpush1.bf16.msra.mxu0 %v1471
    %1558 = vmatprep.subr.bf16.mxu0 0
    %1559 = vmatpush1.bf16.msra.mxu0 %v1470
    %1560 = vmatprep.subr.bf16.mxu0 0
    %1561 = vmatpush1.bf16.msra.mxu0 %v1469
    %1562 = vmatprep.subr.bf16.mxu0 0
    %1563 = vmatpush1.bf16.msra.mxu0 %v1468
    %1564 = vmatprep.subr.bf16.mxu0 0
    %1565 = vmatpush1.bf16.msra.mxu0 %v1467
    %1566 = vmatprep.subr.bf16.mxu0 0
    %1567 = vmatpush1.bf16.msra.mxu0 %v1466
    %1568 = vmatprep.subr.bf16.mxu0 0
    %1569 = vmatpush1.bf16.msra.mxu0 %v1465
    %1570 = vmatprep.subr.bf16.mxu0 0
    %1571 = vmatpush2.bf16.msra.mxu0 0
    %1572 = vmatprep.subr.bf16.mxu0 0
    %1573 = vmatpush2.bf16.msra.mxu0 0
    %1574 = vmatprep.subr.bf16.mxu0 0
    %1575 = vmatpush2.bf16.msra.mxu0 0
    %1576 = vmatprep.subr.bf16.mxu0 0
    %1577 = vmatpush2.bf16.msra.mxu0 0
    %1578 = vmatprep.subr.bf16.mxu0 0
    %1579 = vmatpush2.bf16.msra.mxu0 0
    %1580 = vmatprep.subr.bf16.mxu0 0
    %1581 = vmatpush2.bf16.msra.mxu0 0
    %1582 = vmatprep.subr.bf16.mxu0 0
    %1583 = vmatpush2.bf16.msra.mxu0 0
    %1584 = vmatprep.subr.bf16.mxu0 0
    %1585 = vmatpush2.bf16.msra.mxu0 0
    %1586 = vmatprep.mubr.bf16.mxu0 0
    %1587 = vmatmul.mubr.bf16.gmra.mxu0 %v1342
    %v1588 = vpop.f32.mrf.mxu0
    %v1589 = vadd.f32 %v1532, %v1588
    %v1590 = vpop.f32.mrf.mxu0
    %v1591 = vpop.f32.mrf.mxu0
    %v1592 = vadd.f32 %v1535, %v1591
    %v1593 = vpop.f32.mrf.mxu0
    %1594 = vmatprep.mubr.bf16.mxu0 0
    %1595 = vmatmul.mubr.bf16.gmra.mxu0 %v1345
    %v1596 = vpop.f32.mrf.mxu0
    %v1597 = vadd.f32 %v1540, %v1596
    %v1598 = vpop.f32.mrf.mxu0
    %v1599 = vpop.f32.mrf.mxu0
    %v1600 = vadd.f32 %v1543, %v1599
    %v1601 = vpop.f32.mrf.mxu0
    %1602 = vmatprep.mubr.bf16.mxu0 0
    %1603 = vmatmul.mubr.bf16.gmra.mxu0 %v1348
    %v1604 = vpop.f32.mrf.mxu0
    %v1605 = vadd.f32 %v1548, %v1604
    %v1606 = vpop.f32.mrf.mxu0
    %v1607 = vpop.f32.mrf.mxu0
    %v1608 = vadd.f32 %v1551, %v1607
    %v1609 = vpop.f32.mrf.mxu0
    %1610 = vdwg.mxu0
    %v1611 = vmul.f32 %v1589, 0.01
    %v1612 = vmul.f32 %v1592, 0.01
    %v1613 = vmul.f32 %v1597, 0.01
    %v1614 = vmul.f32 %v1600, 0.01
    %v1615 = vmul.f32 %v1605, 0.01
    %v1616 = vmul.f32 %v1608, 0.01
    %v1617 = vmax.f32 %v1589, %v1611
    %v1618 = vmax.f32 %v1592, %v1612
    %v1619 = vmax.f32 %v1597, %v1613
    %v1620 = vmax.f32 %v1600, %v1614
    %v1621 = vmax.f32 %v1605, %v1615
    %v1622 = vmax.f32 %v1608, %v1616
    %v1623 = vld [vmem:[#allocation2 + $0x300] sm:$0xf]
    %v1624 = vld [vmem:[#allocation2 + $0x304] sm:$0xf]
    %v1625 = vld [vmem:[#allocation2 + $0x308] sm:$0xf]
    %v1626 = vld [vmem:[#allocation2 + $0x30c] sm:$0xf]
    %v1627 = vld [vmem:[#allocation2 + $0x310] sm:$0xf]
    %v1628 = vld [vmem:[#allocation2 + $0x314] sm:$0xf]
    %v1629 = vld [vmem:[#allocation2 + $0x318] sm:$0xf]
    %v1630 = vld [vmem:[#allocation2 + $0x31c] sm:$0xf]
    %v1631 = vld [vmem:[#allocation2 + $0x320] sm:$0xf]
    %v1632 = vld [vmem:[#allocation2 + $0x324] sm:$0xf]
    %v1633 = vld [vmem:[#allocation2 + $0x328] sm:$0xf]
    %v1634 = vld [vmem:[#allocation2 + $0x32c] sm:$0xf]
    %v1635 = vld [vmem:[#allocation2 + $0x330] sm:$0xf]
    %v1636 = vld [vmem:[#allocation2 + $0x334] sm:$0xf]
    %v1637 = vld [vmem:[#allocation2 + $0x338] sm:$0xf]
    %v1638 = vld [vmem:[#allocation2 + $0x33c] sm:$0xf]
    %v1639 = vld [vmem:[#allocation2 + $0x340] sm:$0xf]
    %v1640 = vld [vmem:[#allocation2 + $0x344] sm:$0xf]
    %v1641 = vld [vmem:[#allocation2 + $0x348] sm:$0xf]
    %v1642 = vld [vmem:[#allocation2 + $0x34c] sm:$0xf]
    %v1643 = vld [vmem:[#allocation2 + $0x350] sm:$0xf]
    %v1644 = vld [vmem:[#allocation2 + $0x354] sm:$0xf]
    %v1645 = vld [vmem:[#allocation2 + $0x358] sm:$0xf]
    %v1646 = vld [vmem:[#allocation2 + $0x35c] sm:$0xf]
    %v1647 = vld [vmem:[#allocation2 + $0x360] sm:$0xf]
    %v1648 = vld [vmem:[#allocation2 + $0x364] sm:$0xf]
    %v1649 = vld [vmem:[#allocation2 + $0x368] sm:$0xf]
    %v1650 = vld [vmem:[#allocation2 + $0x36c] sm:$0xf]
    %v1651 = vld [vmem:[#allocation2 + $0x370] sm:$0xf]
    %v1652 = vld [vmem:[#allocation2 + $0x374] sm:$0xf]
    %v1653 = vld [vmem:[#allocation2 + $0x378] sm:$0xf]
    %v1654 = vld [vmem:[#allocation2 + $0x37c] sm:$0xf]
    %v1655 = vld [vmem:[#allocation2 + $0x380] sm:$0xf]
    %v1656 = vld [vmem:[#allocation2 + $0x384] sm:$0xf]
    %v1657 = vld [vmem:[#allocation2 + $0x388] sm:$0xf]
    %v1658 = vld [vmem:[#allocation2 + $0x38c] sm:$0xf]
    %v1659 = vld [vmem:[#allocation2 + $0x390] sm:$0xf]
    %v1660 = vld [vmem:[#allocation2 + $0x394] sm:$0xf]
    %v1661 = vld [vmem:[#allocation2 + $0x398] sm:$0xf]
    %v1662 = vld [vmem:[#allocation2 + $0x39c] sm:$0xf]
    %v1663 = vld [vmem:[#allocation2 + $0x3a0] sm:$0xf]
    %v1664 = vld [vmem:[#allocation2 + $0x3a4] sm:$0xf]
    %v1665 = vld [vmem:[#allocation2 + $0x3a8] sm:$0xf]
    %v1666 = vld [vmem:[#allocation2 + $0x3ac] sm:$0xf]
    %v1667 = vld [vmem:[#allocation2 + $0x3b0] sm:$0xf]
    %v1668 = vld [vmem:[#allocation2 + $0x3b4] sm:$0xf]
    %v1669 = vld [vmem:[#allocation2 + $0x3b8] sm:$0xf]
    %v1670 = vld [vmem:[#allocation2 + $0x3bc] sm:$0xf]
    %v1671 = vrot.slane %v1617, 1
    %v1672 = vrot.slane %v1618, 1
    %v1673 = vrot.slane %v1619, 1
    %v1674 = vrot.slane %v1620, 1
    %v1675 = vrot.slane %v1621, 1
    %v1676 = vrot.slane %v1622, 1
    %v1677 = vsel %vm255, %v1675, %v1676
    %v1678 = vsel %vm255, %v1674, %v1675
    %v1679 = vsel %vm255, %v1673, %v1674
    %v1680 = vsel %vm255, %v1672, %v1673
    %v1681 = vsel %vm255, %v1671, %v1672
    %v1682 = vsel %vm255, %v1676, %v1671
    %v1683 = vrot.slane %v1617, 2
    %v1684 = vrot.slane %v1618, 2
    %v1685 = vrot.slane %v1619, 2
    %v1686 = vrot.slane %v1620, 2
    %v1687 = vrot.slane %v1621, 2
    %v1688 = vrot.slane %v1622, 2
    %v1689 = vsel %vm268, %v1687, %v1688
    %v1690 = vsel %vm268, %v1686, %v1687
    %v1691 = vsel %vm268, %v1685, %v1686
    %v1692 = vsel %vm268, %v1684, %v1685
    %v1693 = vsel %vm268, %v1683, %v1684
    %v1694 = vsel %vm268, %v1688, %v1683
    %v1695 = vpack.c.bf16 %v1618, %v1617
    %v1696 = vpack.c.bf16 %v1680, %v1681
    %v1697 = vpack.c.bf16 %v1692, %v1693
    %v1698 = vpack.c.bf16 %v1620, %v1619
    %v1699 = vpack.c.bf16 %v1678, %v1679
    %v1700 = vpack.c.bf16 %v1690, %v1691
    %v1701 = vpack.c.bf16 %v1622, %v1621
    %v1702 = vpack.c.bf16 %v1682, %v1677
    %v1703 = vpack.c.bf16 %v1694, %v1689
    %v1704 = vlaneseq
    %v1705 = vshrl.u32 %v1704, 7
    %v1706 = vsub.s32 4, %v1705
    %v1707 = vrot.slane %v30, %v1706
    %v1756 = vunpack.c.l.b16 %v1623
    %v1757 = vunpack.c.l.b16 %v1624
    %v1758 = vunpack.c.l.b16 %v1625
    %v1759 = vunpack.c.l.b16 %v1626
    %v1760 = vunpack.c.l.b16 %v1627
    %v1761 = vunpack.c.l.b16 %v1628
    %v1762 = vunpack.c.l.b16 %v1629
    %v1763 = vunpack.c.l.b16 %v1630
    %v1764 = vunpack.c.l.b16 %v1631
    %v1765 = vunpack.c.l.b16 %v1632
    %v1766 = vunpack.c.l.b16 %v1633
    %v1767 = vunpack.c.l.b16 %v1634
    %v1768 = vunpack.c.l.b16 %v1635
    %v1769 = vunpack.c.l.b16 %v1636
    %v1770 = vunpack.c.l.b16 %v1637
    %v1771 = vunpack.c.l.b16 %v1638
    %v1772 = vunpack.c.l.b16 %v1639
    %v1773 = vunpack.c.l.b16 %v1640
    %v1774 = vunpack.c.l.b16 %v1641
    %v1775 = vunpack.c.l.b16 %v1642
    %v1776 = vunpack.c.l.b16 %v1643
    %v1777 = vunpack.c.l.b16 %v1644
    %v1778 = vunpack.c.l.b16 %v1645
    %v1779 = vunpack.c.l.b16 %v1646
    %v1780 = vunpack.c.l.b16 %v1647
    %v1781 = vunpack.c.l.b16 %v1648
    %v1782 = vunpack.c.l.b16 %v1649
    %v1783 = vunpack.c.l.b16 %v1650
    %v1784 = vunpack.c.l.b16 %v1651
    %v1785 = vunpack.c.l.b16 %v1652
    %v1786 = vunpack.c.l.b16 %v1653
    %v1787 = vunpack.c.l.b16 %v1654
    %v1788 = vunpack.c.l.b16 %v1655
    %v1789 = vunpack.c.l.b16 %v1656
    %v1790 = vunpack.c.l.b16 %v1657
    %v1791 = vunpack.c.l.b16 %v1658
    %v1792 = vunpack.c.l.b16 %v1659
    %v1793 = vunpack.c.l.b16 %v1660
    %v1794 = vunpack.c.l.b16 %v1661
    %v1795 = vunpack.c.l.b16 %v1662
    %v1796 = vunpack.c.l.b16 %v1663
    %v1797 = vunpack.c.l.b16 %v1664
    %v1798 = vunpack.c.l.b16 %v1665
    %v1799 = vunpack.c.l.b16 %v1666
    %v1800 = vunpack.c.l.b16 %v1667
    %v1801 = vunpack.c.l.b16 %v1668
    %v1802 = vunpack.c.l.b16 %v1669
    %v1803 = vunpack.c.l.b16 %v1670
    %v1804 = vpack.c.b16 %v1757, %v1756
    %v1805 = vpack.c.b16 %v1759, %v1758
    %v1806 = vpack.c.b16 %v1761, %v1760
    %v1807 = vpack.c.b16 %v1763, %v1762
    %v1808 = vpack.c.b16 %v1765, %v1764
    %v1809 = vpack.c.b16 %v1767, %v1766
    %v1810 = vpack.c.b16 %v1769, %v1768
    %v1811 = vpack.c.b16 %v1771, %v1770
    %v1812 = vpack.c.b16 %v1773, %v1772
    %v1813 = vpack.c.b16 %v1775, %v1774
    %v1814 = vpack.c.b16 %v1777, %v1776
    %v1815 = vpack.c.b16 %v1779, %v1778
    %v1816 = vpack.c.b16 %v1781, %v1780
    %v1817 = vpack.c.b16 %v1783, %v1782
    %v1818 = vpack.c.b16 %v1785, %v1784
    %v1819 = vpack.c.b16 %v1787, %v1786
    %v1820 = vpack.c.b16 %v1789, %v1788
    %v1821 = vpack.c.b16 %v1791, %v1790
    %v1822 = vpack.c.b16 %v1793, %v1792
    %v1823 = vpack.c.b16 %v1795, %v1794
    %v1824 = vpack.c.b16 %v1797, %v1796
    %v1825 = vpack.c.b16 %v1799, %v1798
    %v1826 = vpack.c.b16 %v1801, %v1800
    %v1827 = vpack.c.b16 %v1803, %v1802
    %1852 = vmatprep.subr.bf16.mxu0 0
    %1853 = vmatpush1.bf16.msra.mxu0 %v1811
    %1854 = vmatprep.subr.bf16.mxu0 0
    %1855 = vmatpush1.bf16.msra.mxu0 %v1810
    %1856 = vmatprep.subr.bf16.mxu0 0
    %1857 = vmatpush1.bf16.msra.mxu0 %v1809
    %1858 = vmatprep.subr.bf16.mxu0 0
    %1859 = vmatpush1.bf16.msra.mxu0 %v1808
    %1860 = vmatprep.subr.bf16.mxu0 0
    %1861 = vmatpush1.bf16.msra.mxu0 %v1807
    %1862 = vmatprep.subr.bf16.mxu0 0
    %1863 = vmatpush1.bf16.msra.mxu0 %v1806
    %1864 = vmatprep.subr.bf16.mxu0 0
    %1865 = vmatpush1.bf16.msra.mxu0 %v1805
    %1866 = vmatprep.subr.bf16.mxu0 0
    %1867 = vmatpush1.bf16.msra.mxu0 %v1804
    %1868 = vmatprep.subr.bf16.mxu0 0
    %1869 = vmatpush2.bf16.msra.mxu0 %v1819
    %1870 = vmatprep.subr.bf16.mxu0 0
    %1871 = vmatpush2.bf16.msra.mxu0 %v1818
    %1872 = vmatprep.subr.bf16.mxu0 0
    %1873 = vmatpush2.bf16.msra.mxu0 %v1817
    %1874 = vmatprep.subr.bf16.mxu0 0
    %1875 = vmatpush2.bf16.msra.mxu0 %v1816
    %1876 = vmatprep.subr.bf16.mxu0 0
    %1877 = vmatpush2.bf16.msra.mxu0 %v1815
    %1878 = vmatprep.subr.bf16.mxu0 0
    %1879 = vmatpush2.bf16.msra.mxu0 %v1814
    %1880 = vmatprep.subr.bf16.mxu0 0
    %1881 = vmatpush2.bf16.msra.mxu0 %v1813
    %1882 = vmatprep.subr.bf16.mxu0 0
    %1883 = vmatpush2.bf16.msra.mxu0 %v1812
    %1884 = vmatprep.mubr.bf16.mxu0 %v1696
    %1885 = vmatmul.mubr.bf16.gmra.mxu0 %v1695
    %v1886 = vpop.f32.mrf.mxu0
    %v1887 = vadd.f32 %v1707, %v1886
    %v1888 = vpop.f32.mrf.mxu0
    %v1889 = vpop.f32.mrf.mxu0
    %v1890 = vadd.f32 %v1707, %v1889
    %v1891 = vpop.f32.mrf.mxu0
    %1892 = vmatprep.mubr.bf16.mxu0 %v1699
    %1893 = vmatmul.mubr.bf16.gmra.mxu0 %v1698
    %v1894 = vpop.f32.mrf.mxu0
    %v1895 = vadd.f32 %v1707, %v1894
    %v1896 = vpop.f32.mrf.mxu0
    %v1897 = vpop.f32.mrf.mxu0
    %v1898 = vadd.f32 %v1707, %v1897
    %v1899 = vpop.f32.mrf.mxu0
    %1900 = vmatprep.mubr.bf16.mxu0 %v1702
    %1901 = vmatmul.mubr.bf16.gmra.mxu0 %v1701
    %v1902 = vpop.f32.mrf.mxu0
    %v1903 = vadd.f32 %v1707, %v1902
    %v1904 = vpop.f32.mrf.mxu0
    %v1905 = vpop.f32.mrf.mxu0
    %v1906 = vadd.f32 %v1707, %v1905
    %v1907 = vpop.f32.mrf.mxu0
    %1908 = vdwg.mxu0
    %1909 = vmatprep.subr.bf16.mxu0 0
    %1910 = vmatpush1.bf16.msra.mxu0 %v1827
    %1911 = vmatprep.subr.bf16.mxu0 0
    %1912 = vmatpush1.bf16.msra.mxu0 %v1826
    %1913 = vmatprep.subr.bf16.mxu0 0
    %1914 = vmatpush1.bf16.msra.mxu0 %v1825
    %1915 = vmatprep.subr.bf16.mxu0 0
    %1916 = vmatpush1.bf16.msra.mxu0 %v1824
    %1917 = vmatprep.subr.bf16.mxu0 0
    %1918 = vmatpush1.bf16.msra.mxu0 %v1823
    %1919 = vmatprep.subr.bf16.mxu0 0
    %1920 = vmatpush1.bf16.msra.mxu0 %v1822
    %1921 = vmatprep.subr.bf16.mxu0 0
    %1922 = vmatpush1.bf16.msra.mxu0 %v1821
    %1923 = vmatprep.subr.bf16.mxu0 0
    %1924 = vmatpush1.bf16.msra.mxu0 %v1820
    %1925 = vmatprep.subr.bf16.mxu0 0
    %1926 = vmatpush2.bf16.msra.mxu0 0
    %1927 = vmatprep.subr.bf16.mxu0 0
    %1928 = vmatpush2.bf16.msra.mxu0 0
    %1929 = vmatprep.subr.bf16.mxu0 0
    %1930 = vmatpush2.bf16.msra.mxu0 0
    %1931 = vmatprep.subr.bf16.mxu0 0
    %1932 = vmatpush2.bf16.msra.mxu0 0
    %1933 = vmatprep.subr.bf16.mxu0 0
    %1934 = vmatpush2.bf16.msra.mxu0 0
    %1935 = vmatprep.subr.bf16.mxu0 0
    %1936 = vmatpush2.bf16.msra.mxu0 0
    %1937 = vmatprep.subr.bf16.mxu0 0
    %1938 = vmatpush2.bf16.msra.mxu0 0
    %1939 = vmatprep.subr.bf16.mxu0 0
    %1940 = vmatpush2.bf16.msra.mxu0 0
    %1941 = vmatprep.mubr.bf16.mxu0 0
    %1942 = vmatmul.mubr.bf16.gmra.mxu0 %v1697
    %v1943 = vpop.f32.mrf.mxu0
    %v1944 = vadd.f32 %v1887, %v1943
    %v1945 = vpop.f32.mrf.mxu0
    %v1946 = vpop.f32.mrf.mxu0
    %v1947 = vadd.f32 %v1890, %v1946
    %v1948 = vpop.f32.mrf.mxu0
    %1949 = vmatprep.mubr.bf16.mxu0 0
    %1950 = vmatmul.mubr.bf16.gmra.mxu0 %v1700
    %v1951 = vpop.f32.mrf.mxu0
    %v1952 = vadd.f32 %v1895, %v1951
    %v1953 = vpop.f32.mrf.mxu0
    %v1954 = vpop.f32.mrf.mxu0
    %v1955 = vadd.f32 %v1898, %v1954
    %v1956 = vpop.f32.mrf.mxu0
    %1957 = vmatprep.mubr.bf16.mxu0 0
    %1958 = vmatmul.mubr.bf16.gmra.mxu0 %v1703
    %v1959 = vpop.f32.mrf.mxu0
    %v1960 = vadd.f32 %v1903, %v1959
    %v1961 = vpop.f32.mrf.mxu0
    %v1962 = vpop.f32.mrf.mxu0
    %v1963 = vadd.f32 %v1906, %v1962
    %v1964 = vpop.f32.mrf.mxu0
    %1965 = vdwg.mxu0
    %v1966 = vmul.f32 %v1944, 0.01
    %v1967 = vmul.f32 %v1947, 0.01
    %v1968 = vmul.f32 %v1952, 0.01
    %v1969 = vmul.f32 %v1955, 0.01
    %v1970 = vmul.f32 %v1960, 0.01
    %v1971 = vmul.f32 %v1963, 0.01
    %v1972 = vmax.f32 %v1944, %v1966
    %v1973 = vmax.f32 %v1947, %v1967
    %v1974 = vmax.f32 %v1952, %v1968
    %v1975 = vmax.f32 %v1955, %v1969
    %v1976 = vmax.f32 %v1960, %v1970
    %v1977 = vmax.f32 %v1963, %v1971
    %v1978 = vld [vmem:[#allocation2 + $0x3c0] sm:$0xf]
    %v1979 = vld [vmem:[#allocation2 + $0x3c4] sm:$0xf]
    %v1980 = vld [vmem:[#allocation2 + $0x3c8] sm:$0xf]
    %v1981 = vld [vmem:[#allocation2 + $0x3cc] sm:$0xf]
    %v1982 = vld [vmem:[#allocation2 + $0x3d0] sm:$0xf]
    %v1983 = vld [vmem:[#allocation2 + $0x3d4] sm:$0xf]
    %v1984 = vld [vmem:[#allocation2 + $0x3d8] sm:$0xf]
    %v1985 = vld [vmem:[#allocation2 + $0x3dc] sm:$0xf]
    %v1986 = vld [vmem:[#allocation2 + $0x3e0] sm:$0xf]
    %v1987 = vld [vmem:[#allocation2 + $0x3e4] sm:$0xf]
    %v1988 = vld [vmem:[#allocation2 + $0x3e8] sm:$0xf]
    %v1989 = vld [vmem:[#allocation2 + $0x3ec] sm:$0xf]
    %v1990 = vld [vmem:[#allocation2 + $0x3f0] sm:$0xf]
    %v1991 = vld [vmem:[#allocation2 + $0x3f4] sm:$0xf]
    %v1992 = vld [vmem:[#allocation2 + $0x3f8] sm:$0xf]
    %v1993 = vld [vmem:[#allocation2 + $0x3fc] sm:$0xf]
    %v1994 = vld [vmem:[#allocation2 + $0x400] sm:$0xf]
    %v1995 = vld [vmem:[#allocation2 + $0x404] sm:$0xf]
    %v1996 = vld [vmem:[#allocation2 + $0x408] sm:$0xf]
    %v1997 = vld [vmem:[#allocation2 + $0x40c] sm:$0xf]
    %v1998 = vld [vmem:[#allocation2 + $0x410] sm:$0xf]
    %v1999 = vld [vmem:[#allocation2 + $0x414] sm:$0xf]
    %v2000 = vld [vmem:[#allocation2 + $0x418] sm:$0xf]
    %v2001 = vld [vmem:[#allocation2 + $0x41c] sm:$0xf]
    %v2002 = vld [vmem:[#allocation2 + $0x420] sm:$0xf]
    %v2003 = vld [vmem:[#allocation2 + $0x424] sm:$0xf]
    %v2004 = vld [vmem:[#allocation2 + $0x428] sm:$0xf]
    %v2005 = vld [vmem:[#allocation2 + $0x42c] sm:$0xf]
    %v2006 = vld [vmem:[#allocation2 + $0x430] sm:$0xf]
    %v2007 = vld [vmem:[#allocation2 + $0x434] sm:$0xf]
    %v2008 = vld [vmem:[#allocation2 + $0x438] sm:$0xf]
    %v2009 = vld [vmem:[#allocation2 + $0x43c] sm:$0xf]
    %v2010 = vld [vmem:[#allocation2 + $0x440] sm:$0xf]
    %v2011 = vld [vmem:[#allocation2 + $0x444] sm:$0xf]
    %v2012 = vld [vmem:[#allocation2 + $0x448] sm:$0xf]
    %v2013 = vld [vmem:[#allocation2 + $0x44c] sm:$0xf]
    %v2014 = vld [vmem:[#allocation2 + $0x450] sm:$0xf]
    %v2015 = vld [vmem:[#allocation2 + $0x454] sm:$0xf]
    %v2016 = vld [vmem:[#allocation2 + $0x458] sm:$0xf]
    %v2017 = vld [vmem:[#allocation2 + $0x45c] sm:$0xf]
    %v2018 = vld [vmem:[#allocation2 + $0x460] sm:$0xf]
    %v2019 = vld [vmem:[#allocation2 + $0x464] sm:$0xf]
    %v2020 = vld [vmem:[#allocation2 + $0x468] sm:$0xf]
    %v2021 = vld [vmem:[#allocation2 + $0x46c] sm:$0xf]
    %v2022 = vld [vmem:[#allocation2 + $0x470] sm:$0xf]
    %v2023 = vld [vmem:[#allocation2 + $0x474] sm:$0xf]
    %v2024 = vld [vmem:[#allocation2 + $0x478] sm:$0xf]
    %v2025 = vld [vmem:[#allocation2 + $0x47c] sm:$0xf]
    %v2026 = vrot.slane %v1972, 1
    %v2027 = vrot.slane %v1973, 1
    %v2028 = vrot.slane %v1974, 1
    %v2029 = vrot.slane %v1975, 1
    %v2030 = vrot.slane %v1976, 1
    %v2031 = vrot.slane %v1977, 1
    %v2032 = vsel %vm255, %v2030, %v2031
    %v2033 = vsel %vm255, %v2029, %v2030
    %v2034 = vsel %vm255, %v2028, %v2029
    %v2035 = vsel %vm255, %v2027, %v2028
    %v2036 = vsel %vm255, %v2026, %v2027
    %v2037 = vsel %vm255, %v2031, %v2026
    %v2038 = vrot.slane %v1972, 2
    %v2039 = vrot.slane %v1973, 2
    %v2040 = vrot.slane %v1974, 2
    %v2041 = vrot.slane %v1975, 2
    %v2042 = vrot.slane %v1976, 2
    %v2043 = vrot.slane %v1977, 2
    %v2044 = vsel %vm268, %v2042, %v2043
    %v2045 = vsel %vm268, %v2041, %v2042
    %v2046 = vsel %vm268, %v2040, %v2041
    %v2047 = vsel %vm268, %v2039, %v2040
    %v2048 = vsel %vm268, %v2038, %v2039
    %v2049 = vsel %vm268, %v2043, %v2038
    %v2050 = vpack.c.bf16 %v1973, %v1972
    %v2051 = vpack.c.bf16 %v2035, %v2036
    %v2052 = vpack.c.bf16 %v2047, %v2048
    %v2053 = vpack.c.bf16 %v1975, %v1974
    %v2054 = vpack.c.bf16 %v2033, %v2034
    %v2055 = vpack.c.bf16 %v2045, %v2046
    %v2056 = vpack.c.bf16 %v1977, %v1976
    %v2057 = vpack.c.bf16 %v2037, %v2032
    %v2058 = vpack.c.bf16 %v2049, %v2044
    %v2059 = vlaneseq
    %v2060 = vshrl.u32 %v2059, 7
    %v2061 = vsub.s32 5, %v2060
    %v2062 = vrot.slane %v30, %v2061
    %v2111 = vunpack.c.l.b16 %v1978
    %v2112 = vunpack.c.l.b16 %v1979
    %v2113 = vunpack.c.l.b16 %v1980
    %v2114 = vunpack.c.l.b16 %v1981
    %v2115 = vunpack.c.l.b16 %v1982
    %v2116 = vunpack.c.l.b16 %v1983
    %v2117 = vunpack.c.l.b16 %v1984
    %v2118 = vunpack.c.l.b16 %v1985
    %v2119 = vunpack.c.l.b16 %v1986
    %v2120 = vunpack.c.l.b16 %v1987
    %v2121 = vunpack.c.l.b16 %v1988
    %v2122 = vunpack.c.l.b16 %v1989
    %v2123 = vunpack.c.l.b16 %v1990
    %v2124 = vunpack.c.l.b16 %v1991
    %v2125 = vunpack.c.l.b16 %v1992
    %v2126 = vunpack.c.l.b16 %v1993
    %v2127 = vunpack.c.l.b16 %v1994
    %v2128 = vunpack.c.l.b16 %v1995
    %v2129 = vunpack.c.l.b16 %v1996
    %v2130 = vunpack.c.l.b16 %v1997
    %v2131 = vunpack.c.l.b16 %v1998
    %v2132 = vunpack.c.l.b16 %v1999
    %v2133 = vunpack.c.l.b16 %v2000
    %v2134 = vunpack.c.l.b16 %v2001
    %v2135 = vunpack.c.l.b16 %v2002
    %v2136 = vunpack.c.l.b16 %v2003
    %v2137 = vunpack.c.l.b16 %v2004
    %v2138 = vunpack.c.l.b16 %v2005
    %v2139 = vunpack.c.l.b16 %v2006
    %v2140 = vunpack.c.l.b16 %v2007
    %v2141 = vunpack.c.l.b16 %v2008
    %v2142 = vunpack.c.l.b16 %v2009
    %v2143 = vunpack.c.l.b16 %v2010
    %v2144 = vunpack.c.l.b16 %v2011
    %v2145 = vunpack.c.l.b16 %v2012
    %v2146 = vunpack.c.l.b16 %v2013
    %v2147 = vunpack.c.l.b16 %v2014
    %v2148 = vunpack.c.l.b16 %v2015
    %v2149 = vunpack.c.l.b16 %v2016
    %v2150 = vunpack.c.l.b16 %v2017
    %v2151 = vunpack.c.l.b16 %v2018
    %v2152 = vunpack.c.l.b16 %v2019
    %v2153 = vunpack.c.l.b16 %v2020
    %v2154 = vunpack.c.l.b16 %v2021
    %v2155 = vunpack.c.l.b16 %v2022
    %v2156 = vunpack.c.l.b16 %v2023
    %v2157 = vunpack.c.l.b16 %v2024
    %v2158 = vunpack.c.l.b16 %v2025
    %v2159 = vpack.c.b16 %v2112, %v2111
    %v2160 = vpack.c.b16 %v2114, %v2113
    %v2161 = vpack.c.b16 %v2116, %v2115
    %v2162 = vpack.c.b16 %v2118, %v2117
    %v2163 = vpack.c.b16 %v2120, %v2119
    %v2164 = vpack.c.b16 %v2122, %v2121
    %v2165 = vpack.c.b16 %v2124, %v2123
    %v2166 = vpack.c.b16 %v2126, %v2125
    %v2167 = vpack.c.b16 %v2128, %v2127
    %v2168 = vpack.c.b16 %v2130, %v2129
    %v2169 = vpack.c.b16 %v2132, %v2131
    %v2170 = vpack.c.b16 %v2134, %v2133
    %v2171 = vpack.c.b16 %v2136, %v2135
    %v2172 = vpack.c.b16 %v2138, %v2137
    %v2173 = vpack.c.b16 %v2140, %v2139
    %v2174 = vpack.c.b16 %v2142, %v2141
    %v2175 = vpack.c.b16 %v2144, %v2143
    %v2176 = vpack.c.b16 %v2146, %v2145
    %v2177 = vpack.c.b16 %v2148, %v2147
    %v2178 = vpack.c.b16 %v2150, %v2149
    %v2179 = vpack.c.b16 %v2152, %v2151
    %v2180 = vpack.c.b16 %v2154, %v2153
    %v2181 = vpack.c.b16 %v2156, %v2155
    %v2182 = vpack.c.b16 %v2158, %v2157
    %2207 = vmatprep.subr.bf16.mxu0 0
    %2208 = vmatpush1.bf16.msra.mxu0 %v2166
    %2209 = vmatprep.subr.bf16.mxu0 0
    %2210 = vmatpush1.bf16.msra.mxu0 %v2165
    %2211 = vmatprep.subr.bf16.mxu0 0
    %2212 = vmatpush1.bf16.msra.mxu0 %v2164
    %2213 = vmatprep.subr.bf16.mxu0 0
    %2214 = vmatpush1.bf16.msra.mxu0 %v2163
    %2215 = vmatprep.subr.bf16.mxu0 0
    %2216 = vmatpush1.bf16.msra.mxu0 %v2162
    %2217 = vmatprep.subr.bf16.mxu0 0
    %2218 = vmatpush1.bf16.msra.mxu0 %v2161
    %2219 = vmatprep.subr.bf16.mxu0 0
    %2220 = vmatpush1.bf16.msra.mxu0 %v2160
    %2221 = vmatprep.subr.bf16.mxu0 0
    %2222 = vmatpush1.bf16.msra.mxu0 %v2159
    %2223 = vmatprep.subr.bf16.mxu0 0
    %2224 = vmatpush2.bf16.msra.mxu0 %v2174
    %2225 = vmatprep.subr.bf16.mxu0 0
    %2226 = vmatpush2.bf16.msra.mxu0 %v2173
    %2227 = vmatprep.subr.bf16.mxu0 0
    %2228 = vmatpush2.bf16.msra.mxu0 %v2172
    %2229 = vmatprep.subr.bf16.mxu0 0
    %2230 = vmatpush2.bf16.msra.mxu0 %v2171
    %2231 = vmatprep.subr.bf16.mxu0 0
    %2232 = vmatpush2.bf16.msra.mxu0 %v2170
    %2233 = vmatprep.subr.bf16.mxu0 0
    %2234 = vmatpush2.bf16.msra.mxu0 %v2169
    %2235 = vmatprep.subr.bf16.mxu0 0
    %2236 = vmatpush2.bf16.msra.mxu0 %v2168
    %2237 = vmatprep.subr.bf16.mxu0 0
    %2238 = vmatpush2.bf16.msra.mxu0 %v2167
    %2239 = vmatprep.mubr.bf16.mxu0 %v2051
    %2240 = vmatmul.mubr.bf16.gmra.mxu0 %v2050
    %v2241 = vpop.f32.mrf.mxu0
    %v2242 = vadd.f32 %v2062, %v2241
    %v2243 = vpop.f32.mrf.mxu0
    %v2244 = vpop.f32.mrf.mxu0
    %v2245 = vadd.f32 %v2062, %v2244
    %v2246 = vpop.f32.mrf.mxu0
    %2247 = vmatprep.mubr.bf16.mxu0 %v2054
    %2248 = vmatmul.mubr.bf16.gmra.mxu0 %v2053
    %v2249 = vpop.f32.mrf.mxu0
    %v2250 = vadd.f32 %v2062, %v2249
    %v2251 = vpop.f32.mrf.mxu0
    %v2252 = vpop.f32.mrf.mxu0
    %v2253 = vadd.f32 %v2062, %v2252
    %v2254 = vpop.f32.mrf.mxu0
    %2255 = vmatprep.mubr.bf16.mxu0 %v2057
    %2256 = vmatmul.mubr.bf16.gmra.mxu0 %v2056
    %v2257 = vpop.f32.mrf.mxu0
    %v2258 = vadd.f32 %v2062, %v2257
    %v2259 = vpop.f32.mrf.mxu0
    %v2260 = vpop.f32.mrf.mxu0
    %v2261 = vadd.f32 %v2062, %v2260
    %v2262 = vpop.f32.mrf.mxu0
    %2263 = vdwg.mxu0
    %2264 = vmatprep.subr.bf16.mxu0 0
    %2265 = vmatpush1.bf16.msra.mxu0 %v2182
    %2266 = vmatprep.subr.bf16.mxu0 0
    %2267 = vmatpush1.bf16.msra.mxu0 %v2181
    %2268 = vmatprep.subr.bf16.mxu0 0
    %2269 = vmatpush1.bf16.msra.mxu0 %v2180
    %2270 = vmatprep.subr.bf16.mxu0 0
    %2271 = vmatpush1.bf16.msra.mxu0 %v2179
    %2272 = vmatprep.subr.bf16.mxu0 0
    %2273 = vmatpush1.bf16.msra.mxu0 %v2178
    %2274 = vmatprep.subr.bf16.mxu0 0
    %2275 = vmatpush1.bf16.msra.mxu0 %v2177
    %2276 = vmatprep.subr.bf16.mxu0 0
    %2277 = vmatpush1.bf16.msra.mxu0 %v2176
    %2278 = vmatprep.subr.bf16.mxu0 0
    %2279 = vmatpush1.bf16.msra.mxu0 %v2175
    %2280 = vmatprep.subr.bf16.mxu0 0
    %2281 = vmatpush2.bf16.msra.mxu0 0
    %2282 = vmatprep.subr.bf16.mxu0 0
    %2283 = vmatpush2.bf16.msra.mxu0 0
    %2284 = vmatprep.subr.bf16.mxu0 0
    %2285 = vmatpush2.bf16.msra.mxu0 0
    %2286 = vmatprep.subr.bf16.mxu0 0
    %2287 = vmatpush2.bf16.msra.mxu0 0
    %2288 = vmatprep.subr.bf16.mxu0 0
    %2289 = vmatpush2.bf16.msra.mxu0 0
    %2290 = vmatprep.subr.bf16.mxu0 0
    %2291 = vmatpush2.bf16.msra.mxu0 0
    %2292 = vmatprep.subr.bf16.mxu0 0
    %2293 = vmatpush2.bf16.msra.mxu0 0
    %2294 = vmatprep.subr.bf16.mxu0 0
    %2295 = vmatpush2.bf16.msra.mxu0 0
    %2296 = vmatprep.mubr.bf16.mxu0 0
    %2297 = vmatmul.mubr.bf16.gmra.mxu0 %v2052
    %v2298 = vpop.f32.mrf.mxu0
    %v2299 = vadd.f32 %v2242, %v2298
    %v2300 = vpop.f32.mrf.mxu0
    %v2301 = vpop.f32.mrf.mxu0
    %v2302 = vadd.f32 %v2245, %v2301
    %v2303 = vpop.f32.mrf.mxu0
    %2304 = vmatprep.mubr.bf16.mxu0 0
    %2305 = vmatmul.mubr.bf16.gmra.mxu0 %v2055
    %v2306 = vpop.f32.mrf.mxu0
    %v2307 = vadd.f32 %v2250, %v2306
    %v2308 = vpop.f32.mrf.mxu0
    %v2309 = vpop.f32.mrf.mxu0
    %v2310 = vadd.f32 %v2253, %v2309
    %v2311 = vpop.f32.mrf.mxu0
    %2312 = vmatprep.mubr.bf16.mxu0 0
    %2313 = vmatmul.mubr.bf16.gmra.mxu0 %v2058
    %v2314 = vpop.f32.mrf.mxu0
    %v2315 = vadd.f32 %v2258, %v2314
    %v2316 = vpop.f32.mrf.mxu0
    %v2317 = vpop.f32.mrf.mxu0
    %v2318 = vadd.f32 %v2261, %v2317
    %v2319 = vpop.f32.mrf.mxu0
    %2320 = vdwg.mxu0
    %v2321 = vmul.f32 %v2299, 0.01
    %v2322 = vmul.f32 %v2302, 0.01
    %v2323 = vmul.f32 %v2307, 0.01
    %v2324 = vmul.f32 %v2310, 0.01
    %v2325 = vmul.f32 %v2315, 0.01
    %v2326 = vmul.f32 %v2318, 0.01
    %v2327 = vmax.f32 %v2299, %v2321
    %v2328 = vmax.f32 %v2302, %v2322
    %v2329 = vmax.f32 %v2307, %v2323
    %v2330 = vmax.f32 %v2310, %v2324
    %v2331 = vmax.f32 %v2315, %v2325
    %v2332 = vmax.f32 %v2318, %v2326
    %v2333 = vadd.s32 %v254, 8
    %v2334 = vadd.s32 %v254, 16
    %vm2335 = vcmp.lt.s32.totalorder %v254, 8
    %vm2336 = vcmp.lt.s32.totalorder %v2333, 8
    %vm2337 = vcmp.lt.s32.totalorder %v2334, 8
    %v2338 = vsel %vm2335, %v2327, -1e+30
    %v2339 = vsel %vm2336, %v2328, -1e+30
    %v2340 = vsel %vm2337, %v2329, -1e+30
    %v2341 = vsel %vm2335, %v2330, -1e+30
    %v2342 = vsel %vm2336, %v2331, -1e+30
    %v2343 = vsel %vm2337, %v2332, -1e+30
    %v2344 = vmax.f32 %v2338, %v2340
    %v2345 = vmax.f32 %v2344, %v2339
    %v2346 = vrot.slane %v2345, 4
    %v2347 = vmax.f32 %v2345, %v2346
    %v2348 = vrot.slane %v2347, 2
    %v2349 = vmax.f32 %v2347, %v2348
    %v2350 = vrot.slane %v2349, 1
    %v2351 = vmax.f32 %v2349, %v2350
    %v2352 = vmax.f32 %v2341, %v2343
    %v2353 = vmax.f32 %v2352, %v2342
    %v2354 = vrot.slane %v2353, 4
    %v2355 = vmax.f32 %v2353, %v2354
    %v2356 = vrot.slane %v2355, 2
    %v2357 = vmax.f32 %v2355, %v2356
    %v2358 = vrot.slane %v2357, 1
    %v2359 = vmax.f32 %v2357, %v2358
    %v2360 = vld [vmem:[#allocation2 + $0x480] sm:$0xf]
    %v2361 = vld [vmem:[#allocation2 + $0x484] sm:$0xf]
    %v2362 = vld [vmem:[#allocation2 + $0x488] sm:$0xf]
    %v2363 = vld [vmem:[#allocation2 + $0x48c] sm:$0xf]
    %v2364 = vld [vmem:[#allocation2 + $0x490] sm:$0xf]
    %v2365 = vld [vmem:[#allocation2 + $0x494] sm:$0xf]
    %v2366 = vld [vmem:[#allocation2 + $0x498] sm:$0xf]
    %v2367 = vld [vmem:[#allocation2 + $0x49c] sm:$0xf]
    %v2368 = vld [vmem:[#allocation2 + $0x4a0] sm:$0xf]
    %v2369 = vld [vmem:[#allocation2 + $0x4a4] sm:$0xf]
    %v2370 = vld [vmem:[#allocation2 + $0x4a8] sm:$0xf]
    %v2371 = vld [vmem:[#allocation2 + $0x4ac] sm:$0xf]
    %v2372 = vld [vmem:[#allocation2 + $0x4b0] sm:$0xf]
    %v2373 = vld [vmem:[#allocation2 + $0x4b4] sm:$0xf]
    %v2374 = vld [vmem:[#allocation2 + $0x4b8] sm:$0xf]
    %v2375 = vld [vmem:[#allocation2 + $0x4bc] sm:$0xf]
    %v2376 = vpack.c.bf16 %v2351, %v2351
    %v2377 = vpack.c.bf16 %v2359, %v2359
    %v2378 = vlaneseq
    %v2379 = vshrl.u32 %v2378, 7
    %v2380 = vsub.s32 6, %v2379
    %v2381 = vrot.slane %v30, %v2380
    %v2384 = vunpack.c.l.b16 %v2376
    %v2385 = vunpack.c.l.b16 %v2377
    %vm2386 = vcmask 1041409
    %v2387 = vsel %vm2386, %v2385, %v2384
    %v2388 = vpack.c.b16 %v2387, %v2387
    %v2406 = vunpack.c.l.b16 %v2360
    %v2407 = vunpack.c.l.b16 %v2361
    %v2408 = vunpack.c.l.b16 %v2362
    %v2409 = vunpack.c.l.b16 %v2363
    %v2410 = vunpack.c.l.b16 %v2364
    %v2411 = vunpack.c.l.b16 %v2365
    %v2412 = vunpack.c.l.b16 %v2366
    %v2413 = vunpack.c.l.b16 %v2367
    %v2414 = vunpack.c.l.b16 %v2368
    %v2415 = vunpack.c.l.b16 %v2369
    %v2416 = vunpack.c.l.b16 %v2370
    %v2417 = vunpack.c.l.b16 %v2371
    %v2418 = vunpack.c.l.b16 %v2372
    %v2419 = vunpack.c.l.b16 %v2373
    %v2420 = vunpack.c.l.b16 %v2374
    %v2421 = vunpack.c.l.b16 %v2375
    %v2422 = vpack.c.b16 %v2407, %v2406
    %v2423 = vpack.c.b16 %v2409, %v2408
    %v2424 = vpack.c.b16 %v2411, %v2410
    %v2425 = vpack.c.b16 %v2413, %v2412
    %v2426 = vpack.c.b16 %v2415, %v2414
    %v2427 = vpack.c.b16 %v2417, %v2416
    %v2428 = vpack.c.b16 %v2419, %v2418
    %v2429 = vpack.c.b16 %v2421, %v2420
    %2438 = vmatprep.subr.bf16.mxu0 0
    %2439 = vmatpush1.bf16.msra.mxu0 %v2429
    %2440 = vmatprep.subr.bf16.mxu0 0
    %2441 = vmatpush1.bf16.msra.mxu0 %v2428
    %2442 = vmatprep.subr.bf16.mxu0 0
    %2443 = vmatpush1.bf16.msra.mxu0 %v2427
    %2444 = vmatprep.subr.bf16.mxu0 0
    %2445 = vmatpush1.bf16.msra.mxu0 %v2426
    %2446 = vmatprep.subr.bf16.mxu0 0
    %2447 = vmatpush1.bf16.msra.mxu0 %v2425
    %2448 = vmatprep.subr.bf16.mxu0 0
    %2449 = vmatpush1.bf16.msra.mxu0 %v2424
    %2450 = vmatprep.subr.bf16.mxu0 0
    %2451 = vmatpush1.bf16.msra.mxu0 %v2423
    %2452 = vmatprep.subr.bf16.mxu0 0
    %2453 = vmatpush1.bf16.msra.mxu0 %v2422
    %2454 = vmatprep.subr.bf16.mxu0 0
    %2455 = vmatpush2.bf16.msra.mxu0 0
    %2456 = vmatprep.subr.bf16.mxu0 0
    %2457 = vmatpush2.bf16.msra.mxu0 0
    %2458 = vmatprep.subr.bf16.mxu0 0
    %2459 = vmatpush2.bf16.msra.mxu0 0
    %2460 = vmatprep.subr.bf16.mxu0 0
    %2461 = vmatpush2.bf16.msra.mxu0 0
    %2462 = vmatprep.subr.bf16.mxu0 0
    %2463 = vmatpush2.bf16.msra.mxu0 0
    %2464 = vmatprep.subr.bf16.mxu0 0
    %2465 = vmatpush2.bf16.msra.mxu0 0
    %2466 = vmatprep.subr.bf16.mxu0 0
    %2467 = vmatpush2.bf16.msra.mxu0 0
    %2468 = vmatprep.subr.bf16.mxu0 0
    %2469 = vmatpush2.bf16.msra.mxu0 0
    %2470 = vmatprep.mubr.bf16.mxu0 0
    %2471 = vmatmul.mubr.bf16.gmra.mxu0 %v2388
    %v2472 = vpop.f32.mrf.mxu0
    %v2473 = vadd.f32 %v2381, %v2472
    %v2474 = vpop.f32.mrf.mxu0
    %v2475 = vpop.f32.mrf.mxu0
    %v2476 = vpop.f32.mrf.mxu0
    %2477 = vdwg.mxu0
    %vm2478 = vcmp.lt.s32.totalorder %v54, 6
    %v2479 = vsel %vm2478, %v2473, -1e+30
    %vm2480 = vcmask 1041408
    %v2481 = vsel %vm2480, %v2479, -inf
    %2482 = vmax.xlane.f32.xlu0 %v2481
    %v2483 = vpop.xlane.xlu0 %2482
    %v2484 = vsub.f32 %v2479, %v2483
    %v2485 = vmul.f32 %v2484, 1.442695
    %v2486 = vpow.pop %v2485
    %v2487 = vsel %vm2480, %v2486, 0.0
    %2488 = vadd.xlane.f32.xlu0 %v2487
    %v2489 = vpop.xlane.xlu0 %2488
    %v2490 = vrcp.pop %v2489
    %v2491 = vmul.f32 %v2486, %v2490
    %2492 = vst [vmem:[#allocation5] sm:$0x3] %v2491
    // Predicated region
    $region18: #{conv_forward.1} parent=1 // pred_check
      _
    $region19: #{conv_forward.1} parent=1 // pred_check_branch
      %2494 = sbr.rel (0) target = $region21
    $region20: #{conv_forward.1} parent=1 // pred_region
      %s2496 = ssub.s32 32, 32
      %2497 = vsyncadd [#allocation4], %s2496
      %s2499 = sshll.u32 [#allocation5], 4
      %s2500 = int_to_ptr.vmem [resolvable:$true] %s2499
      %2502 = dma.vmem_to_hbm [thread:$0]  %s2500, 32, %s3, [#allocation4]
    $region21: #{conv_forward.1} parent=1 // pred_fallthru
      _
    // Predicated region
    $region22: #{conv_forward.1} parent=1 // pred_check
      _
    $region23: #{conv_forward.1} parent=1 // pred_check_branch
      %2504 = sbr.rel (0) target = $region25
    $region24: #{conv_forward.1} parent=1 // pred_region
      %2505 = dma.done [#allocation4], 32
    $region25: #{conv_forward.1} parent=1 // pred_fallthru
      _
    %2506 = vsyncpa [#allocation3], 1
    %2507 = vsyncpa [#allocation4], 1

</llo_original>
